<compile_context>
chip_gen: v5e
topology: v5e:2x2
jax: 0.10.0
libtpu: 0.0.40
codegen_flags: <defaults>
</compile_context>

<pallas_src>
import functools

import jax
import jax.numpy as jnp
import numpy as np
from jax import lax
from jax.experimental import pallas as pl
from jax.experimental.pallas import tpu as pltpu

_LANE = 128
_BF16_SUBLANE_TILE = 16   # bf16 native sublane tile: keep t_pad a multiple of 16


def _round_up(x, m):
    return (x + m - 1) // m * m


# ----------------------------- Pallas kernel --------------------------------


def _tcn_kernel(*refs, kernel_size, layer_meta, t_pad, per_tap):
    """Fused TemporalConvNet forward for one batch-block.

    refs = (x_ref, w1_0, b1_0, w2_0, b2_0, w1_1, ..., o_ref)
    x_ref/o_ref: (b_blk * t_pad, c_pad)   [time-major rows, channels on lanes]
    layer_meta = ((dilation, has_downsample), ...) per TemporalBlock (static).
    """
    x_ref, o_ref = refs[0], refs[-1]
    w_refs = refs[1:-1]
    k = kernel_size

    M, C = x_ref.shape            # M = b_blk * t_pad, C = c_pad (=128)
    b_blk = M // t_pad

    # Time index within each batch element, hoisted once for all layers/taps.
    # (3-D iota + merge avoids an integer mod on the vector unit.)
    t_in = lax.broadcasted_iota(jnp.int32, (b_blk, t_pad, C), 1).reshape(M, C)

    act_bf = x_ref[...]                       # (M, C) bf16  (s=0 tap / residual)
    act_f = act_bf.astype(jnp.float32)        # roll source (f32 sublane rotate)

    idx = 0
    for d, has_down in layer_meta:            # static unroll over layers
        w1_ref, b1_ref, w2_ref, b2_ref = w_refs[idx:idx + 4]
        idx += 4

        def conv(src_f, src_bf, w_ref, b_ref):
            """Causal dilated conv (+ any folded 1x1) as MXU GEMM(s), f32 out."""
            n_out = w_ref.shape[-1]
            taps = []
            for j in range(k):
                s = (k - 1 - j) * d           # delay of this tap (Chomp1d shift)
                if s == 0:
                    taps.append(src_bf)
                elif s >= t_pad:
                    taps.append(jnp.zeros((M, C), jnp.bfloat16))
                else:
                    # Roll the merged (M, C) slab: rows that would cross a batch
                    # boundary (t_in < s) are exactly the rows masked to zero,
                    # so rolling the merged slab is safe and stays 2-D.
                    rolled = pltpu.roll(src_f, shift=s, axis=0)
                    tap = jnp.where(t_in >= s, rolled, 0.0)
                    taps.append(tap.astype(jnp.bfloat16))
            if per_tap:
                # v5e: k accumulating K=128 GEMMs, no lane-concat window temp.
                acc = jnp.zeros((M, n_out), jnp.float32)
                for j, tap in enumerate(taps):
                    acc = acc + jnp.dot(tap, w_ref[j * C:(j + 1) * C, :],
                                        preferred_element_type=jnp.float32)
                return acc + b_ref[...]
            # v6e/v7x: one fused K=k*C GEMM (deep-MXU friendly).
            window = taps[0] if k == 1 else jnp.concatenate(taps, axis=-1)
            return jnp.dot(window, w_ref[...],
                           preferred_element_type=jnp.float32) + b_ref[...]

        # conv1 (+ folded 1x1 downsample as extra output columns).
        y = conv(act_f, act_bf, w1_ref, b1_ref)
        if has_down:
            h1 = jnp.maximum(y[:, :C], 0.0)
            res = y[:, C:]                    # f32: x @ wd + bd from the same GEMM
        else:
            h1 = jnp.maximum(y, 0.0)
            res = act_bf                      # keep residual bf16; promote at add
        # dropout1: identity (eval mode)

        # conv2.
        h1_bf = h1.astype(jnp.bfloat16)
        h2 = conv(h1, h1_bf, w2_ref, b2_ref)
        # dropout2: identity (eval mode)

        out_f = jnp.maximum(jnp.maximum(h2, 0.0) + res, 0.0)
        act_f = out_f
        act_bf = out_f.astype(jnp.bfloat16)   # bf16 hand-off to the next block

    o_ref[...] = act_bf                       # bf16 output (half the writeback)


# ------------------------------ glue / params -------------------------------


def _prepare_fused_params(params, k, c_pad):
    """Pad / reshape per-layer weights for the fused kernel.

    Returns a flat list [w1, b1, w2, b2] per layer (w1 widened to 2*c_pad when
    the layer has a 1x1 downsample, with wd folded into the last-tap block),
    plus static per-layer metadata (dilation, has_downsample).
    """
    flat, meta = [], []
    for i, (w1, b1, w2, b2, wd, bd) in enumerate(params):
        d = 2 ** i

        def pad_w(w):  # (k, cin, cout) -> (k*c_pad, c_pad) bf16
            kk, ci, co = w.shape
            wp = jnp.zeros((kk, c_pad, c_pad), jnp.float32).at[:, :ci, :co].set(w)
            return wp.reshape(kk * c_pad, c_pad).astype(jnp.bfloat16)

        def pad_b(b):  # (1, cout) -> (1, c_pad) f32
            return jnp.zeros((1, c_pad), jnp.float32).at[:, : b.shape[1]].set(b)

        w1m, b1m = pad_w(w1), pad_b(b1)
        w2m, b2m = pad_w(w2), pad_b(b2)

        has_down = wd is not None
        if has_down:
            # Fold the 1x1 downsample into conv1: the last tap (shift 0) of the
            # causal window is exactly the unshifted input x.
            wdp = jnp.zeros((k * c_pad, c_pad), jnp.float32)
            wdp = wdp.at[(k - 1) * c_pad:(k - 1) * c_pad + wd.shape[0],
                         : wd.shape[1]].set(wd)
            w1m = jnp.concatenate([w1m, wdp.astype(jnp.bfloat16)], axis=1)
            b1m = jnp.concatenate([b1m, pad_b(bd)], axis=1)

        flat += [w1m, b1m, w2m, b2m]
        meta.append((d, has_down))
    return flat, tuple(meta)


def _prefer_per_tap_gemm():
    """v5e's MXU is 4x128^2: a K=k*128 GEMM is split into 128-deep passes anyway,
    so per-tap K=128 accumulation costs the same MXU time and skips the window
    lane-concat.  v6e/v7x (256-deep MXU) keep the fused GEMM."""
    try:
        kind = jax.devices()[0].device_kind.lower()
    except Exception:
        return False
    return "v5" in kind


def _vmem_limit_bytes():
    """~75% of physical VMEM, capped: ~96 MiB on v5e/v6e, ~48 MiB on v7x."""
    try:
        cap = int(pltpu.get_tpu_info().vmem_capacity_bytes)
    except Exception:
        cap = 64 * 1024 * 1024
    return max(32 * 1024 * 1024, min(100 * 1024 * 1024, (cap * 3) // 4))


def temporal_conv_net(x_bct, params, kernel_size):
    """Forward of TemporalConvNet.  x_bct: (B, C, T) f32 -> (B, C_last, T) bf16."""
    B, C_in, T = x_bct.shape
    chans = [C_in] + [p[0].shape[2] for p in params]
    c_pad = _round_up(max(chans), _LANE)
    t_pad = _round_up(T, _BF16_SUBLANE_TILE)

    # Batch block: stack batch elements so the GEMM M-dim targets >=256 rows.
    b_blk = max(1, min(B, 256 // max(t_pad, 1)))
    # v7x has 2 TensorCores: prefer >=2 grid steps, but only if M stays >=128.
    if (B // b_blk) < 2 and B >= 2 and (b_blk // 2) * t_pad >= 128:
        b_blk = max(1, b_blk // 2)
    b_pad = _round_up(B, b_blk)
    n_steps = b_pad // b_blk

    # [B, C, T] -> [B, T, C]: cast to bf16 FIRST (halves the transpose/pad HBM
    # traffic), zero-pad batch/time/channels, then merge (batch, time) rows.
    x = jnp.transpose(x_bct.astype(jnp.bfloat16), (0, 2, 1))
    x = jnp.pad(x, ((0, b_pad - B), (0, t_pad - T), (0, c_pad - C_in)))
    x = x.reshape(b_pad * t_pad, c_pad)

    flat, meta = _prepare_fused_params(params, kernel_size, c_pad)

    kernel = functools.partial(
        _tcn_kernel, kernel_size=kernel_size, layer_meta=meta,
        t_pad=t_pad, per_tap=_prefer_per_tap_gemm())

    rows = b_blk * t_pad
    io_spec = pl.BlockSpec((rows, c_pad), lambda b: (b, 0))
    # Weights: untiled, VMEM-resident constants — no per-step double-buffer DMA.
    w_specs = [pl.BlockSpec(memory_space=pltpu.MemorySpace.VMEM) for _ in flat]

    # TODO(synk): for long sequences add a halo'd ("arbitrary") time-tile grid
    # axis sized against the per-chip VMEM budget (v7x needs ~half the v6e tile).
    out = pl.pallas_call(
        kernel,
        grid=(n_steps,),
        out_shape=jax.ShapeDtypeStruct((b_pad * t_pad, c_pad), jnp.bfloat16),
        in_specs=[io_spec] + w_specs,
        out_specs=io_spec,
        compiler_params=pltpu.CompilerParams(
            dimension_semantics=("parallel",),
            vmem_limit_bytes=_vmem_limit_bytes(),
        ),
    )(x, *flat)

    c_last = chans[-1]
    out = out.reshape(b_pad, t_pad, c_pad)[:B, :T, :c_last]   # bf16, sliced lazily
    return jnp.transpose(out, (0, 2, 1))                      # (B, C_last, T) bf16


def init_params(key, num_inputs, num_channels, kernel_size):
    """Deterministic synthetic parameters, matching shapes of the torch module.

    weight_norm(Conv1d) effective weight: w = g * v / ||v|| (norm over (cin, k)
    per output channel), computed once in plain JAX glue.
    """
    params = []
    chans = [num_inputs] + list(num_channels)
    for cin, cout in zip(chans[:-1], chans[1:]):
        key, k0, k1, k2, k3, k4, k5, k6, k7 = jax.random.split(key, 9)

        def wn_conv(kv, kg, cin_, cout_):
            v = 0.01 * jax.random.normal(kv, (cout_, cin_, kernel_size), jnp.float32)
            g = 1.0 + 0.1 * jax.random.normal(kg, (cout_,), jnp.float32)
            norm = jnp.sqrt(jnp.sum(v * v, axis=(1, 2), keepdims=True))
            w = g[:, None, None] * v / norm           # (cout, cin, k), torch layout
            return jnp.transpose(w, (2, 1, 0))         # (k, cin, cout) for kernel

        w1 = wn_conv(k0, k1, cin, cout)
        b1 = 0.01 * jax.random.normal(k2, (1, cout), jnp.float32)
        w2 = wn_conv(k3, k4, cout, cout)
        b2 = 0.01 * jax.random.normal(k5, (1, cout), jnp.float32)
        if cin != cout:
            wd_t = 0.01 * jax.random.normal(k6, (cout, cin, 1), jnp.float32)
            wd = jnp.transpose(wd_t[:, :, 0])          # (cin, cout)
            bd = 0.01 * jax.random.normal(k7, (1, cout), jnp.float32)
        else:
            wd, bd = None, None
        params.append((w1, b1, w2, b2, wd, bd))
    return params


# ------------------------------ pure-JAX reference --------------------------
# Mirrors the kernel's precision flow (bf16 matmul inputs, f32 accumulation).


def _ref_block(x, p, k, d):
    w1, b1, w2, b2, wd, bd = p

    def conv(inp_bf, w, b):
        T = inp_bf.shape[1]
        acc = jnp.zeros(inp_bf.shape[:2] + (w.shape[2],), jnp.float32)
        for j in range(k):
            s = (k - 1 - j) * d
            shifted = jnp.pad(inp_bf, ((0, 0), (s, 0), (0, 0)))[:, :T, :]
            acc = acc + jnp.einsum("btc,cd->btd", shifted,
                                   w[j].astype(jnp.bfloat16),
                                   preferred_element_type=jnp.float32)
        return acc + b[None]

    x_bf = x.astype(jnp.bfloat16)
    h1 = jax.nn.relu(conv(x_bf, w1, b1))
    h2 = jax.nn.relu(conv(h1.astype(jnp.bfloat16), w2, b2))
    if wd is None:
        res = x_bf.astype(jnp.float32)
    else:
        res = jnp.einsum("btc,cd->btd", x_bf, wd.astype(jnp.bfloat16),
                         preferred_element_type=jnp.float32) + bd[None]
    return jax.nn.relu(h2 + res)


def _ref_tcn(x_bct, params, kernel_size):
    x = jnp.transpose(x_bct, (0, 2, 1)).astype(jnp.float32)
    for i, p in enumerate(params):
        x = _ref_block(x, p, kernel_size, 2 ** i)
    return jnp.transpose(x, (0, 2, 1))


# ----------------------------------- main ------------------------------------

if __name__ == "__main__":
    B, C_in, T = 2, 4, 16
    num_channels = [8, 8, 16]
    kernel_size = 2

    key = jax.random.PRNGKey(0)
    kx, kp = jax.random.split(key)
    x = jax.random.normal(kx, (B, C_in, T), jnp.float32)   # PyTorch [B, C, T]
    params = init_params(kp, C_in, num_channels, kernel_size)

    out = jax.block_until_ready(temporal_conv_net(x, params, kernel_size))
    ref = jax.block_until_ready(_ref_tcn(x, params, kernel_size))

    assert out.shape == (B, num_channels[-1], T), out.shape
    out_f32 = np.asarray(out.astype(jnp.float32))
    assert np.allclose(out_f32, np.asarray(ref), atol=1e-2, rtol=1e-2)

    print("KERNEL_OK")
</pallas_src>

<mosaic_0001>
module attributes {stable_mosaic.version = 11 : i64} {
  func.func @_tcn_kernel(%arg0: i32, %arg1: memref<32x128xbf16, #tpu.memory_space<vmem>>, %arg2: memref<256x256xbf16, #tpu.memory_space<vmem>>, %arg3: memref<1x256xf32, #tpu.memory_space<vmem>>, %arg4: memref<256x128xbf16, #tpu.memory_space<vmem>>, %arg5: memref<1x128xf32, #tpu.memory_space<vmem>>, %arg6: memref<256x128xbf16, #tpu.memory_space<vmem>>, %arg7: memref<1x128xf32, #tpu.memory_space<vmem>>, %arg8: memref<256x128xbf16, #tpu.memory_space<vmem>>, %arg9: memref<1x128xf32, #tpu.memory_space<vmem>>, %arg10: memref<256x256xbf16, #tpu.memory_space<vmem>>, %arg11: memref<1x256xf32, #tpu.memory_space<vmem>>, %arg12: memref<256x128xbf16, #tpu.memory_space<vmem>>, %arg13: memref<1x128xf32, #tpu.memory_space<vmem>>, %arg14: memref<32x128xbf16, #tpu.memory_space<vmem>>) attributes {dimension_semantics = [#tpu.dimension_semantics<parallel>], iteration_bounds = array<i64: 1>, scalar_prefetch = 0 : i64, scratch_operands = 0 : i64, tpu.core_type = #tpu.core_type<tc>, window_params = [{transform_indices = @transform_0, window_bounds = array<i64: 32, 128>}, {pipeline_mode = #tpu.pipeline_mode<synchronous>, transform_indices = @transform_1, window_bounds = array<i64: 256, 256>}, {pipeline_mode = #tpu.pipeline_mode<synchronous>, transform_indices = @transform_2, window_bounds = array<i64: 1, 256>}, {pipeline_mode = #tpu.pipeline_mode<synchronous>, transform_indices = @transform_3, window_bounds = array<i64: 256, 128>}, {pipeline_mode = #tpu.pipeline_mode<synchronous>, transform_indices = @transform_4, window_bounds = array<i64: 1, 128>}, {pipeline_mode = #tpu.pipeline_mode<synchronous>, transform_indices = @transform_5, window_bounds = array<i64: 256, 128>}, {pipeline_mode = #tpu.pipeline_mode<synchronous>, transform_indices = @transform_6, window_bounds = array<i64: 1, 128>}, {pipeline_mode = #tpu.pipeline_mode<synchronous>, transform_indices = @transform_7, window_bounds = array<i64: 256, 128>}, {pipeline_mode = #tpu.pipeline_mode<synchronous>, transform_indices = @transform_8, window_bounds = array<i64: 1, 128>}, {pipeline_mode = #tpu.pipeline_mode<synchronous>, transform_indices = @transform_9, window_bounds = array<i64: 256, 256>}, {pipeline_mode = #tpu.pipeline_mode<synchronous>, transform_indices = @transform_10, window_bounds = array<i64: 1, 256>}, {pipeline_mode = #tpu.pipeline_mode<synchronous>, transform_indices = @transform_11, window_bounds = array<i64: 256, 128>}, {pipeline_mode = #tpu.pipeline_mode<synchronous>, transform_indices = @transform_12, window_bounds = array<i64: 1, 128>}, {transform_indices = @transform_13, window_bounds = array<i64: 32, 128>}]} {
    %0 = tpu.iota {dimensions = array<i32: 1>} : vector<2x16x128xi32>
    %1 = vector.shape_cast %0 : vector<2x16x128xi32> to vector<32x128xi32>
    %c0 = arith.constant 0 : index
    %c0_0 = arith.constant 0 : index
    %2 = vector.load %arg1[%c0, %c0_0] : memref<32x128xbf16, #tpu.memory_space<vmem>>, vector<32x128xbf16>
    %3 = arith.extf %2 : vector<32x128xbf16> to vector<32x128xf32>
    %c1_i32 = arith.constant 1 : i32
    %4 = tpu.dynamic_rotate %3 by %c1_i32 dim 0 : vector<32x128xf32>, i32 -> vector<32x128xf32>
    %c1_i32_1 = arith.constant 1 : i32
    %5 = vector.broadcast %c1_i32_1 : i32 to vector<32x128xi32>
    %6 = arith.cmpi sge, %1, %5 : vector<32x128xi32>
    %cst = arith.constant 0.000000e+00 : f32
    %7 = vector.broadcast %cst : f32 to vector<32x128xf32>
    %8 = arith.select %6, %4, %7 : vector<32x128xi1>, vector<32x128xf32>
    %9 = arith.truncf %8 : vector<32x128xf32> to vector<32x128xbf16>
    %10 = tpu.concatenate %9, %2 in 1 : vector<32x128xbf16>, vector<32x128xbf16> -> vector<32x256xbf16>
    %c0_2 = arith.constant 0 : index
    %c0_3 = arith.constant 0 : index
    %11 = vector.load %arg2[%c0_2, %c0_3] : memref<256x256xbf16, #tpu.memory_space<vmem>>, vector<256x256xbf16>
    %cst_4 = arith.constant dense<0.000000e+00> : vector<32x256xf32>
    %12 = tpu.matmul %10, %11, %cst_4 {dimension_numbers = #tpu.dot_dimension_numbers<[1], [0], [0], [1], [0, 0, 1, 1], [], []>} : vector<32x256xbf16>, vector<256x256xbf16>, vector<32x256xf32> -> vector<32x256xf32>
    %c0_5 = arith.constant 0 : index
    %c0_6 = arith.constant 0 : index
    %13 = vector.load %arg3[%c0_5, %c0_6] : memref<1x256xf32, #tpu.memory_space<vmem>>, vector<1x256xf32>
    %14 = vector.broadcast %13 : vector<1x256xf32> to vector<32x256xf32>
    %15 = arith.addf %12, %14 : vector<32x256xf32>
    %16 = vector.extract_strided_slice %15 {offsets = [0, 0], sizes = [32, 128], strides = [1, 1]} : vector<32x256xf32> to vector<32x128xf32>
    %cst_7 = arith.constant 0.000000e+00 : f32
    %17 = vector.broadcast %cst_7 : f32 to vector<32x128xf32>
    %18 = arith.maximumf %16, %17 : vector<32x128xf32>
    %19 = vector.extract_strided_slice %15 {offsets = [0, 128], sizes = [32, 128], strides = [1, 1]} : vector<32x256xf32> to vector<32x128xf32>
    %20 = arith.truncf %18 : vector<32x128xf32> to vector<32x128xbf16>
    %c1_i32_8 = arith.constant 1 : i32
    %21 = tpu.dynamic_rotate %18 by %c1_i32_8 dim 0 : vector<32x128xf32>, i32 -> vector<32x128xf32>
    %c1_i32_9 = arith.constant 1 : i32
    %22 = vector.broadcast %c1_i32_9 : i32 to vector<32x128xi32>
    %23 = arith.cmpi sge, %1, %22 : vector<32x128xi32>
    %cst_10 = arith.constant 0.000000e+00 : f32
    %24 = vector.broadcast %cst_10 : f32 to vector<32x128xf32>
    %25 = arith.select %23, %21, %24 : vector<32x128xi1>, vector<32x128xf32>
    %26 = arith.truncf %25 : vector<32x128xf32> to vector<32x128xbf16>
    %27 = tpu.concatenate %26, %20 in 1 : vector<32x128xbf16>, vector<32x128xbf16> -> vector<32x256xbf16>
    %c0_11 = arith.constant 0 : index
    %c0_12 = arith.constant 0 : index
    %28 = vector.load %arg4[%c0_11, %c0_12] : memref<256x128xbf16, #tpu.memory_space<vmem>>, vector<256x128xbf16>
    %cst_13 = arith.constant dense<0.000000e+00> : vector<32x128xf32>
    %29 = tpu.matmul %27, %28, %cst_13 {dimension_numbers = #tpu.dot_dimension_numbers<[1], [0], [0], [1], [0, 0, 1, 1], [], []>} : vector<32x256xbf16>, vector<256x128xbf16>, vector<32x128xf32> -> vector<32x128xf32>
    %c0_14 = arith.constant 0 : index
    %c0_15 = arith.constant 0 : index
    %30 = vector.load %arg5[%c0_14, %c0_15] : memref<1x128xf32, #tpu.memory_space<vmem>>, vector<1x128xf32>
    %31 = vector.broadcast %30 : vector<1x128xf32> to vector<32x128xf32>
    %32 = arith.addf %29, %31 : vector<32x128xf32>
    %cst_16 = arith.constant 0.000000e+00 : f32
    %33 = vector.broadcast %cst_16 : f32 to vector<32x128xf32>
    %34 = arith.maximumf %32, %33 : vector<32x128xf32>
    %35 = arith.addf %34, %19 : vector<32x128xf32>
    %cst_17 = arith.constant 0.000000e+00 : f32
    %36 = vector.broadcast %cst_17 : f32 to vector<32x128xf32>
    %37 = arith.maximumf %35, %36 : vector<32x128xf32>
    %38 = arith.truncf %37 : vector<32x128xf32> to vector<32x128xbf16>
    %c2_i32 = arith.constant 2 : i32
    %39 = tpu.dynamic_rotate %37 by %c2_i32 dim 0 : vector<32x128xf32>, i32 -> vector<32x128xf32>
    %c2_i32_18 = arith.constant 2 : i32
    %40 = vector.broadcast %c2_i32_18 : i32 to vector<32x128xi32>
    %41 = arith.cmpi sge, %1, %40 : vector<32x128xi32>
    %cst_19 = arith.constant 0.000000e+00 : f32
    %42 = vector.broadcast %cst_19 : f32 to vector<32x128xf32>
    %43 = arith.select %41, %39, %42 : vector<32x128xi1>, vector<32x128xf32>
    %44 = arith.truncf %43 : vector<32x128xf32> to vector<32x128xbf16>
    %45 = tpu.concatenate %44, %38 in 1 : vector<32x128xbf16>, vector<32x128xbf16> -> vector<32x256xbf16>
    %c0_20 = arith.constant 0 : index
    %c0_21 = arith.constant 0 : index
    %46 = vector.load %arg6[%c0_20, %c0_21] : memref<256x128xbf16, #tpu.memory_space<vmem>>, vector<256x128xbf16>
    %cst_22 = arith.constant dense<0.000000e+00> : vector<32x128xf32>
    %47 = tpu.matmul %45, %46, %cst_22 {dimension_numbers = #tpu.dot_dimension_numbers<[1], [0], [0], [1], [0, 0, 1, 1], [], []>} : vector<32x256xbf16>, vector<256x128xbf16>, vector<32x128xf32> -> vector<32x128xf32>
    %c0_23 = arith.constant 0 : index
    %c0_24 = arith.constant 0 : index
    %48 = vector.load %arg7[%c0_23, %c0_24] : memref<1x128xf32, #tpu.memory_space<vmem>>, vector<1x128xf32>
    %49 = vector.broadcast %48 : vector<1x128xf32> to vector<32x128xf32>
    %50 = arith.addf %47, %49 : vector<32x128xf32>
    %cst_25 = arith.constant 0.000000e+00 : f32
    %51 = vector.broadcast %cst_25 : f32 to vector<32x128xf32>
    %52 = arith.maximumf %50, %51 : vector<32x128xf32>
    %53 = arith.truncf %52 : vector<32x128xf32> to vector<32x128xbf16>
    %c2_i32_26 = arith.constant 2 : i32
    %54 = tpu.dynamic_rotate %52 by %c2_i32_26 dim 0 : vector<32x128xf32>, i32 -> vector<32x128xf32>
    %c2_i32_27 = arith.constant 2 : i32
    %55 = vector.broadcast %c2_i32_27 : i32 to vector<32x128xi32>
    %56 = arith.cmpi sge, %1, %55 : vector<32x128xi32>
    %cst_28 = arith.constant 0.000000e+00 : f32
    %57 = vector.broadcast %cst_28 : f32 to vector<32x128xf32>
    %58 = arith.select %56, %54, %57 : vector<32x128xi1>, vector<32x128xf32>
    %59 = arith.truncf %58 : vector<32x128xf32> to vector<32x128xbf16>
    %60 = tpu.concatenate %59, %53 in 1 : vector<32x128xbf16>, vector<32x128xbf16> -> vector<32x256xbf16>
    %c0_29 = arith.constant 0 : index
    %c0_30 = arith.constant 0 : index
    %61 = vector.load %arg8[%c0_29, %c0_30] : memref<256x128xbf16, #tpu.memory_space<vmem>>, vector<256x128xbf16>
    %cst_31 = arith.constant dense<0.000000e+00> : vector<32x128xf32>
    %62 = tpu.matmul %60, %61, %cst_31 {dimension_numbers = #tpu.dot_dimension_numbers<[1], [0], [0], [1], [0, 0, 1, 1], [], []>} : vector<32x256xbf16>, vector<256x128xbf16>, vector<32x128xf32> -> vector<32x128xf32>
    %c0_32 = arith.constant 0 : index
    %c0_33 = arith.constant 0 : index
    %63 = vector.load %arg9[%c0_32, %c0_33] : memref<1x128xf32, #tpu.memory_space<vmem>>, vector<1x128xf32>
    %64 = vector.broadcast %63 : vector<1x128xf32> to vector<32x128xf32>
    %65 = arith.addf %62, %64 : vector<32x128xf32>
    %cst_34 = arith.constant 0.000000e+00 : f32
    %66 = vector.broadcast %cst_34 : f32 to vector<32x128xf32>
    %67 = arith.maximumf %65, %66 : vector<32x128xf32>
    %68 = arith.extf %38 : vector<32x128xbf16> to vector<32x128xf32>
    %69 = arith.addf %67, %68 : vector<32x128xf32>
    %cst_35 = arith.constant 0.000000e+00 : f32
    %70 = vector.broadcast %cst_35 : f32 to vector<32x128xf32>
    %71 = arith.maximumf %69, %70 : vector<32x128xf32>
    %72 = arith.truncf %71 : vector<32x128xf32> to vector<32x128xbf16>
    %c4_i32 = arith.constant 4 : i32
    %73 = tpu.dynamic_rotate %71 by %c4_i32 dim 0 : vector<32x128xf32>, i32 -> vector<32x128xf32>
    %c4_i32_36 = arith.constant 4 : i32
    %74 = vector.broadcast %c4_i32_36 : i32 to vector<32x128xi32>
    %75 = arith.cmpi sge, %1, %74 : vector<32x128xi32>
    %cst_37 = arith.constant 0.000000e+00 : f32
    %76 = vector.broadcast %cst_37 : f32 to vector<32x128xf32>
    %77 = arith.select %75, %73, %76 : vector<32x128xi1>, vector<32x128xf32>
    %78 = arith.truncf %77 : vector<32x128xf32> to vector<32x128xbf16>
    %79 = tpu.concatenate %78, %72 in 1 : vector<32x128xbf16>, vector<32x128xbf16> -> vector<32x256xbf16>
    %c0_38 = arith.constant 0 : index
    %c0_39 = arith.constant 0 : index
    %80 = vector.load %arg10[%c0_38, %c0_39] : memref<256x256xbf16, #tpu.memory_space<vmem>>, vector<256x256xbf16>
    %cst_40 = arith.constant dense<0.000000e+00> : vector<32x256xf32>
    %81 = tpu.matmul %79, %80, %cst_40 {dimension_numbers = #tpu.dot_dimension_numbers<[1], [0], [0], [1], [0, 0, 1, 1], [], []>} : vector<32x256xbf16>, vector<256x256xbf16>, vector<32x256xf32> -> vector<32x256xf32>
    %c0_41 = arith.constant 0 : index
    %c0_42 = arith.constant 0 : index
    %82 = vector.load %arg11[%c0_41, %c0_42] : memref<1x256xf32, #tpu.memory_space<vmem>>, vector<1x256xf32>
    %83 = vector.broadcast %82 : vector<1x256xf32> to vector<32x256xf32>
    %84 = arith.addf %81, %83 : vector<32x256xf32>
    %85 = vector.extract_strided_slice %84 {offsets = [0, 0], sizes = [32, 128], strides = [1, 1]} : vector<32x256xf32> to vector<32x128xf32>
    %cst_43 = arith.constant 0.000000e+00 : f32
    %86 = vector.broadcast %cst_43 : f32 to vector<32x128xf32>
    %87 = arith.maximumf %85, %86 : vector<32x128xf32>
    %88 = vector.extract_strided_slice %84 {offsets = [0, 128], sizes = [32, 128], strides = [1, 1]} : vector<32x256xf32> to vector<32x128xf32>
    %89 = arith.truncf %87 : vector<32x128xf32> to vector<32x128xbf16>
    %c4_i32_44 = arith.constant 4 : i32
    %90 = tpu.dynamic_rotate %87 by %c4_i32_44 dim 0 : vector<32x128xf32>, i32 -> vector<32x128xf32>
    %c4_i32_45 = arith.constant 4 : i32
    %91 = vector.broadcast %c4_i32_45 : i32 to vector<32x128xi32>
    %92 = arith.cmpi sge, %1, %91 : vector<32x128xi32>
    %cst_46 = arith.constant 0.000000e+00 : f32
    %93 = vector.broadcast %cst_46 : f32 to vector<32x128xf32>
    %94 = arith.select %92, %90, %93 : vector<32x128xi1>, vector<32x128xf32>
    %95 = arith.truncf %94 : vector<32x128xf32> to vector<32x128xbf16>
    %96 = tpu.concatenate %95, %89 in 1 : vector<32x128xbf16>, vector<32x128xbf16> -> vector<32x256xbf16>
    %c0_47 = arith.constant 0 : index
    %c0_48 = arith.constant 0 : index
    %97 = vector.load %arg12[%c0_47, %c0_48] : memref<256x128xbf16, #tpu.memory_space<vmem>>, vector<256x128xbf16>
    %cst_49 = arith.constant dense<0.000000e+00> : vector<32x128xf32>
    %98 = tpu.matmul %96, %97, %cst_49 {dimension_numbers = #tpu.dot_dimension_numbers<[1], [0], [0], [1], [0, 0, 1, 1], [], []>} : vector<32x256xbf16>, vector<256x128xbf16>, vector<32x128xf32> -> vector<32x128xf32>
    %c0_50 = arith.constant 0 : index
    %c0_51 = arith.constant 0 : index
    %99 = vector.load %arg13[%c0_50, %c0_51] : memref<1x128xf32, #tpu.memory_space<vmem>>, vector<1x128xf32>
    %100 = vector.broadcast %99 : vector<1x128xf32> to vector<32x128xf32>
    %101 = arith.addf %98, %100 : vector<32x128xf32>
    %cst_52 = arith.constant 0.000000e+00 : f32
    %102 = vector.broadcast %cst_52 : f32 to vector<32x128xf32>
    %103 = arith.maximumf %101, %102 : vector<32x128xf32>
    %104 = arith.addf %103, %88 : vector<32x128xf32>
    %cst_53 = arith.constant 0.000000e+00 : f32
    %105 = vector.broadcast %cst_53 : f32 to vector<32x128xf32>
    %106 = arith.maximumf %104, %105 : vector<32x128xf32>
    %107 = arith.truncf %106 : vector<32x128xf32> to vector<32x128xbf16>
    %c0_54 = arith.constant 0 : index
    %c0_55 = arith.constant 0 : index
    %108 = vector.load %arg14[%c0_54, %c0_55] : memref<32x128xbf16, #tpu.memory_space<vmem>>, vector<32x128xbf16>
    tpu.vector_store %arg14[%c0_54, %c0_55], %107 {strides = array<i32>} : memref<32x128xbf16, #tpu.memory_space<vmem>>, vector<32x128xbf16>,
    return
  }
  func.func @transform_0(%arg0: i32) -> (i32, i32) {
    %c0_i32 = arith.constant 0 : i32
    %c0_i32_0 = arith.constant 0 : i32
    return %arg0, %c0_i32 : i32, i32
  }
  func.func @transform_1(%arg0: i32) -> (i32, i32) {
    %c0_i32 = arith.constant 0 : i32
    %c0_i32_0 = arith.constant 0 : i32
    %c0_i32_1 = arith.constant 0 : i32
    return %c0_i32, %c0_i32_0 : i32, i32
  }
  func.func @transform_2(%arg0: i32) -> (i32, i32) {
    %c0_i32 = arith.constant 0 : i32
    %c0_i32_0 = arith.constant 0 : i32
    %c0_i32_1 = arith.constant 0 : i32
    return %c0_i32, %c0_i32_0 : i32, i32
  }
  func.func @transform_3(%arg0: i32) -> (i32, i32) {
    %c0_i32 = arith.constant 0 : i32
    %c0_i32_0 = arith.constant 0 : i32
    %c0_i32_1 = arith.constant 0 : i32
    return %c0_i32, %c0_i32_0 : i32, i32
  }
  func.func @transform_4(%arg0: i32) -> (i32, i32) {
    %c0_i32 = arith.constant 0 : i32
    %c0_i32_0 = arith.constant 0 : i32
    %c0_i32_1 = arith.constant 0 : i32
    return %c0_i32, %c0_i32_0 : i32, i32
  }
  func.func @transform_5(%arg0: i32) -> (i32, i32) {
    %c0_i32 = arith.constant 0 : i32
    %c0_i32_0 = arith.constant 0 : i32
    %c0_i32_1 = arith.constant 0 : i32
    return %c0_i32, %c0_i32_0 : i32, i32
  }
  func.func @transform_6(%arg0: i32) -> (i32, i32) {
    %c0_i32 = arith.constant 0 : i32
    %c0_i32_0 = arith.constant 0 : i32
    %c0_i32_1 = arith.constant 0 : i32
    return %c0_i32, %c0_i32_0 : i32, i32
  }
  func.func @transform_7(%arg0: i32) -> (i32, i32) {
    %c0_i32 = arith.constant 0 : i32
    %c0_i32_0 = arith.constant 0 : i32
    %c0_i32_1 = arith.constant 0 : i32
    return %c0_i32, %c0_i32_0 : i32, i32
  }
  func.func @transform_8(%arg0: i32) -> (i32, i32) {
    %c0_i32 = arith.constant 0 : i32
    %c0_i32_0 = arith.constant 0 : i32
    %c0_i32_1 = arith.constant 0 : i32
    return %c0_i32, %c0_i32_0 : i32, i32
  }
  func.func @transform_9(%arg0: i32) -> (i32, i32) {
    %c0_i32 = arith.constant 0 : i32
    %c0_i32_0 = arith.constant 0 : i32
    %c0_i32_1 = arith.constant 0 : i32
    return %c0_i32, %c0_i32_0 : i32, i32
  }
  func.func @transform_10(%arg0: i32) -> (i32, i32) {
    %c0_i32 = arith.constant 0 : i32
    %c0_i32_0 = arith.constant 0 : i32
    %c0_i32_1 = arith.constant 0 : i32
    return %c0_i32, %c0_i32_0 : i32, i32
  }
  func.func @transform_11(%arg0: i32) -> (i32, i32) {
    %c0_i32 = arith.constant 0 : i32
    %c0_i32_0 = arith.constant 0 : i32
    %c0_i32_1 = arith.constant 0 : i32
    return %c0_i32, %c0_i32_0 : i32, i32
  }
  func.func @transform_12(%arg0: i32) -> (i32, i32) {
    %c0_i32 = arith.constant 0 : i32
    %c0_i32_0 = arith.constant 0 : i32
    %c0_i32_1 = arith.constant 0 : i32
    return %c0_i32, %c0_i32_0 : i32, i32
  }
  func.func @transform_13(%arg0: i32) -> (i32, i32) {
    %c0_i32 = arith.constant 0 : i32
    %c0_i32_0 = arith.constant 0 : i32
    return %arg0, %c0_i32 : i32, i32
  }
}

</mosaic_0001>

<llo_original>
// kernel: tpu_custom_call.1
$region0: #{tpu_custom_call.1}
  #allocation0 [shape = 'u32[]', space=smem, size = 0x4, offset = 0x4, fixed_abs, tag = 'smem constant byte address 0x4 - core index']
  #allocation1 [shape = 'u32[72,128]{1,0:T(1,128)}', space=vmem, size = 0x9000, scoped, tag = 'internal scratch']
  %s0 = inlined_call_operand.hbm [shape: bf16[32,128], index: 0, kind: input, shape index: {}]
  %s1 = inlined_call_operand.hbm [shape: bf16[256,256], index: 1, kind: input, shape index: {}]
  %s2 = inlined_call_operand.hbm [shape: f32[1,256], index: 2, kind: input, shape index: {}]
  %s3 = inlined_call_operand.hbm [shape: bf16[256,128], index: 3, kind: input, shape index: {}]
  %s4 = inlined_call_operand.vmem [shape: f32[1,128], index: 4, kind: input, shape index: {}]
  %s5 = inlined_call_operand.hbm [shape: bf16[256,128], index: 5, kind: input, shape index: {}]
  %s6 = inlined_call_operand.vmem [shape: f32[1,128], index: 6, kind: input, shape index: {}]
  %s7 = inlined_call_operand.hbm [shape: bf16[256,128], index: 7, kind: input, shape index: {}]
  %s8 = inlined_call_operand.vmem [shape: f32[1,128], index: 8, kind: input, shape index: {}]
  %s9 = inlined_call_operand.hbm [shape: bf16[256,256], index: 9, kind: input, shape index: {}]
  %s10 = inlined_call_operand.vmem [shape: f32[1,256], index: 10, kind: input, shape index: {}]
  %s11 = inlined_call_operand.hbm [shape: bf16[256,128], index: 11, kind: input, shape index: {}]
  %s12 = inlined_call_operand.vmem [shape: f32[1,128], index: 12, kind: input, shape index: {}]
  %s13 = inlined_call_operand.hbm [shape: bf16[32,128], index: 13, kind: output, shape index: {}]
  %s14 = sld [smem:[#allocation0]]
  $region94: #{tpu_custom_call.1} parent=0
    _
  %s16 = ssub.s32 1, %s14
  %s17 = scalar_select 0, %s16, %s14
  $region1: #{tpu_custom_call.1} parent=0
    #allocation2 [shape = 'u8[8192]{0}', space=vmem, size = 0x2000, scoped, tag = 'input window, operand 0, single buffered']
    #allocation3 [shape = 's32[1]{0}', space=sflag, size = 0x4, scoped, tag = 'scoped memory for tpu_custom_call.1']
    #allocation4 [shape = 's32[1]{0}', space=sflag, size = 0x4, scoped, tag = 'scoped memory for tpu_custom_call.1']
    #allocation5 [shape = 'u8[131072]{0}', space=vmem, size = 0x20000, scoped, tag = 'input window, operand 1, single buffered']
    #allocation6 [shape = 's32[1]{0}', space=sflag, size = 0x4, scoped, tag = 'scoped memory for tpu_custom_call.1']
    #allocation7 [shape = 'u8[1024]{0}', space=vmem, size = 0x400, scoped, tag = 'input window, operand 2, single buffered']
    #allocation8 [shape = 'u8[65536]{0}', space=vmem, size = 0x10000, scoped, tag = 'input window, operand 3, single buffered']
    #allocation9 [shape = 's32[1]{0}', space=sflag, size = 0x4, scoped, tag = 'scoped memory for tpu_custom_call.1']
    #allocation10 [shape = 'u8[65536]{0}', space=vmem, size = 0x10000, scoped, tag = 'input window, operand 5, single buffered']
    #allocation11 [shape = 'u8[65536]{0}', space=vmem, size = 0x10000, scoped, tag = 'input window, operand 7, single buffered']
    #allocation12 [shape = 's32[1]{0}', space=sflag, size = 0x4, scoped, tag = 'scoped memory for tpu_custom_call.1']
    #allocation13 [shape = 'u8[131072]{0}', space=vmem, size = 0x20000, scoped, tag = 'input window, operand 9, single buffered']
    #allocation14 [shape = 'u8[65536]{0}', space=vmem, size = 0x10000, scoped, tag = 'input window, operand 11, single buffered']
    #allocation15 [shape = 's32[1]{0}', space=sflag, size = 0x4, scoped, tag = 'scoped memory for tpu_custom_call.1']
    #allocation16 [shape = 'u8[8192]{0}', space=vmem, size = 0x2000, scoped, tag = 'output window, operand 0, single buffered']
    %18 = vsyncpa [#allocation3], 0
    %19 = vsyncpa [#allocation6], 0
    %20 = vsyncpa [#allocation9], 0
    %21 = vsyncpa [#allocation12], 0
    %22 = vsyncpa [#allocation15], 0
    %23 = vsyncpa [#allocation4], 0
    // Predicated region
    $region2: #{tpu_custom_call.1} parent=1 // pred_check
      _
    $region3: #{tpu_custom_call.1} parent=1 // pred_check_branch
      %25 = sbr.rel (0) target = $region5
    $region4: #{tpu_custom_call.1} parent=1 // pred_region
      %27 = vsyncadd [#allocation3], 0
      %s28 = sshll.u32 %s0, 4
      %s29 = int_to_ptr.hbm [resolvable:$true] %s28
      %s30 = sshll.u32 [#allocation2], 4
      %s31 = int_to_ptr.vmem [resolvable:$true] %s30
      %36 = dma.hbm_to_vmem [thread:$0]  %s29, 256, %s31, [#allocation3], 64, 64, 4
    $region5: #{tpu_custom_call.1} parent=1 // pred_fallthru
      _
    // Predicated region
    $region6: #{tpu_custom_call.1} parent=1 // pred_check
      _
    $region7: #{tpu_custom_call.1} parent=1 // pred_check_branch
      %38 = sbr.rel (0) target = $region9
    $region8: #{tpu_custom_call.1} parent=1 // pred_region
      %40 = vsyncadd [#allocation6], 0
      %s41 = sshll.u32 %s1, 4
      %s42 = int_to_ptr.hbm [resolvable:$true] %s41
      %s43 = sshll.u32 [#allocation5], 4
      %s44 = int_to_ptr.vmem [resolvable:$true] %s43
      %49 = dma.hbm_to_vmem [thread:$0]  %s42, 4096, %s44, [#allocation6], 128, 128, 8
    $region9: #{tpu_custom_call.1} parent=1 // pred_fallthru
      _
    // Predicated region
    $region10: #{tpu_custom_call.1} parent=1 // pred_check
      _
    $region11: #{tpu_custom_call.1} parent=1 // pred_check_branch
      %51 = sbr.rel (0) target = $region13
    $region12: #{tpu_custom_call.1} parent=1 // pred_region
      %53 = vsyncadd [#allocation6], 0
      %s55 = sshll.u32 %s2, 4
      %s56 = int_to_ptr.hbm [resolvable:$true] %s55
      %s57 = sshll.u32 [#allocation7], 4
      %s58 = int_to_ptr.vmem [resolvable:$true] %s57
      %60 = dma.hbm_to_vmem [thread:$0]  %s56, 32, %s58, [#allocation6]
    $region13: #{tpu_custom_call.1} parent=1 // pred_fallthru
      _
    // Predicated region
    $region14: #{tpu_custom_call.1} parent=1 // pred_check
      _
    $region15: #{tpu_custom_call.1} parent=1 // pred_check_branch
      %62 = sbr.rel (0) target = $region17
    $region16: #{tpu_custom_call.1} parent=1 // pred_region
      %64 = vsyncadd [#allocation9], 0
      %s65 = sshll.u32 %s3, 4
      %s66 = int_to_ptr.hbm [resolvable:$true] %s65
      %s67 = sshll.u32 [#allocation8], 4
      %s68 = int_to_ptr.vmem [resolvable:$true] %s67
      %73 = dma.hbm_to_vmem [thread:$0]  %s66, 2048, %s68, [#allocation9], 64, 64, 4
    $region17: #{tpu_custom_call.1} parent=1 // pred_fallthru
      _
    // Predicated region
    $region18: #{tpu_custom_call.1} parent=1 // pred_check
      _
    $region19: #{tpu_custom_call.1} parent=1 // pred_check_branch
      %75 = sbr.rel (0) target = $region21
    $region20: #{tpu_custom_call.1} parent=1 // pred_region
      _
    $region21: #{tpu_custom_call.1} parent=1 // pred_fallthru
      _
    // Predicated region
    $region22: #{tpu_custom_call.1} parent=1 // pred_check
      _
    $region23: #{tpu_custom_call.1} parent=1 // pred_check_branch
      %77 = sbr.rel (0) target = $region25
    $region24: #{tpu_custom_call.1} parent=1 // pred_region
      %79 = vsyncadd [#allocation9], 0
      %s80 = sshll.u32 %s5, 4
      %s81 = int_to_ptr.hbm [resolvable:$true] %s80
      %s82 = sshll.u32 [#allocation10], 4
      %s83 = int_to_ptr.vmem [resolvable:$true] %s82
      %88 = dma.hbm_to_vmem [thread:$0]  %s81, 2048, %s83, [#allocation9], 64, 64, 4
    $region25: #{tpu_custom_call.1} parent=1 // pred_fallthru
      _
    // Predicated region
    $region26: #{tpu_custom_call.1} parent=1 // pred_check
      _
    $region27: #{tpu_custom_call.1} parent=1 // pred_check_branch
      %90 = sbr.rel (0) target = $region29
    $region28: #{tpu_custom_call.1} parent=1 // pred_region
      _
    $region29: #{tpu_custom_call.1} parent=1 // pred_fallthru
      _
    // Predicated region
    $region30: #{tpu_custom_call.1} parent=1 // pred_check
      _
    $region31: #{tpu_custom_call.1} parent=1 // pred_check_branch
      %92 = sbr.rel (0) target = $region33
    $region32: #{tpu_custom_call.1} parent=1 // pred_region
      %94 = vsyncadd [#allocation12], 0
      %s95 = sshll.u32 %s7, 4
      %s96 = int_to_ptr.hbm [resolvable:$true] %s95
      %s97 = sshll.u32 [#allocation11], 4
      %s98 = int_to_ptr.vmem [resolvable:$true] %s97
      %103 = dma.hbm_to_vmem [thread:$0]  %s96, 2048, %s98, [#allocation12], 64, 64, 4
    $region33: #{tpu_custom_call.1} parent=1 // pred_fallthru
      _
    // Predicated region
    $region34: #{tpu_custom_call.1} parent=1 // pred_check
      _
    $region35: #{tpu_custom_call.1} parent=1 // pred_check_branch
      %105 = sbr.rel (0) target = $region37
    $region36: #{tpu_custom_call.1} parent=1 // pred_region
      _
    $region37: #{tpu_custom_call.1} parent=1 // pred_fallthru
      _
    // Predicated region
    $region38: #{tpu_custom_call.1} parent=1 // pred_check
      _
    $region39: #{tpu_custom_call.1} parent=1 // pred_check_branch
      %107 = sbr.rel (0) target = $region41
    $region40: #{tpu_custom_call.1} parent=1 // pred_region
      %109 = vsyncadd [#allocation12], 0
      %s110 = sshll.u32 %s9, 4
      %s111 = int_to_ptr.hbm [resolvable:$true] %s110
      %s112 = sshll.u32 [#allocation13], 4
      %s113 = int_to_ptr.vmem [resolvable:$true] %s112
      %118 = dma.hbm_to_vmem [thread:$0]  %s111, 4096, %s113, [#allocation12], 128, 128, 8
    $region41: #{tpu_custom_call.1} parent=1 // pred_fallthru
      _
    // Predicated region
    $region42: #{tpu_custom_call.1} parent=1 // pred_check
      _
    $region43: #{tpu_custom_call.1} parent=1 // pred_check_branch
      %120 = sbr.rel (0) target = $region45
    $region44: #{tpu_custom_call.1} parent=1 // pred_region
      _
    $region45: #{tpu_custom_call.1} parent=1 // pred_fallthru
      _
    // Predicated region
    $region46: #{tpu_custom_call.1} parent=1 // pred_check
      _
    $region47: #{tpu_custom_call.1} parent=1 // pred_check_branch
      %122 = sbr.rel (0) target = $region49
    $region48: #{tpu_custom_call.1} parent=1 // pred_region
      %124 = vsyncadd [#allocation15], 0
      %s125 = sshll.u32 %s11, 4
      %s126 = int_to_ptr.hbm [resolvable:$true] %s125
      %s127 = sshll.u32 [#allocation14], 4
      %s128 = int_to_ptr.vmem [resolvable:$true] %s127
      %133 = dma.hbm_to_vmem [thread:$0]  %s126, 2048, %s128, [#allocation15], 64, 64, 4
    $region49: #{tpu_custom_call.1} parent=1 // pred_fallthru
      _
    // Predicated region
    $region50: #{tpu_custom_call.1} parent=1 // pred_check
      _
    $region51: #{tpu_custom_call.1} parent=1 // pred_check_branch
      %135 = sbr.rel (0) target = $region53
    $region52: #{tpu_custom_call.1} parent=1 // pred_region
      _
    $region53: #{tpu_custom_call.1} parent=1 // pred_fallthru
      _
    // Predicated region
    $region54: #{tpu_custom_call.1} parent=1 // pred_check
      _
    $region55: #{tpu_custom_call.1} parent=1 // pred_check_branch
      %137 = sbr.rel (0) target = $region57
    $region56: #{tpu_custom_call.1} parent=1 // pred_region
      %139 = dma.done [#allocation3], 256
    $region57: #{tpu_custom_call.1} parent=1 // pred_fallthru
      _
    // Predicated region
    $region58: #{tpu_custom_call.1} parent=1 // pred_check
      _
    $region59: #{tpu_custom_call.1} parent=1 // pred_check_branch
      %141 = sbr.rel (0) target = $region61
    $region60: #{tpu_custom_call.1} parent=1 // pred_region
      %143 = dma.done [#allocation6], 4096
    $region61: #{tpu_custom_call.1} parent=1 // pred_fallthru
      _
    // Predicated region
    $region62: #{tpu_custom_call.1} parent=1 // pred_check
      _
    $region63: #{tpu_custom_call.1} parent=1 // pred_check_branch
      %145 = sbr.rel (0) target = $region65
    $region64: #{tpu_custom_call.1} parent=1 // pred_region
      %147 = dma.done [#allocation6], 32
    $region65: #{tpu_custom_call.1} parent=1 // pred_fallthru
      _
    // Predicated region
    $region66: #{tpu_custom_call.1} parent=1 // pred_check
      _
    $region67: #{tpu_custom_call.1} parent=1 // pred_check_branch
      %149 = sbr.rel (0) target = $region69
    $region68: #{tpu_custom_call.1} parent=1 // pred_region
      %151 = dma.done [#allocation9], 2048
    $region69: #{tpu_custom_call.1} parent=1 // pred_fallthru
      _
    // Predicated region
    $region70: #{tpu_custom_call.1} parent=1 // pred_check
      _
    $region71: #{tpu_custom_call.1} parent=1 // pred_check_branch
      %153 = sbr.rel (0) target = $region73
    $region72: #{tpu_custom_call.1} parent=1 // pred_region
      %155 = dma.done [#allocation9], 2048
    $region73: #{tpu_custom_call.1} parent=1 // pred_fallthru
      _
    // Predicated region
    $region74: #{tpu_custom_call.1} parent=1 // pred_check
      _
    $region75: #{tpu_custom_call.1} parent=1 // pred_check_branch
      %157 = sbr.rel (0) target = $region77
    $region76: #{tpu_custom_call.1} parent=1 // pred_region
      %159 = dma.done [#allocation12], 2048
    $region77: #{tpu_custom_call.1} parent=1 // pred_fallthru
      _
    // Predicated region
    $region78: #{tpu_custom_call.1} parent=1 // pred_check
      _
    $region79: #{tpu_custom_call.1} parent=1 // pred_check_branch
      %161 = sbr.rel (0) target = $region81
    $region80: #{tpu_custom_call.1} parent=1 // pred_region
      %163 = dma.done [#allocation12], 4096
    $region81: #{tpu_custom_call.1} parent=1 // pred_fallthru
      _
    // Predicated region
    $region82: #{tpu_custom_call.1} parent=1 // pred_check
      _
    $region83: #{tpu_custom_call.1} parent=1 // pred_check_branch
      %165 = sbr.rel (0) target = $region85
    $region84: #{tpu_custom_call.1} parent=1 // pred_region
      %167 = dma.done [#allocation15], 2048
    $region85: #{tpu_custom_call.1} parent=1 // pred_fallthru
      _
    %v168 = vlaneseq
    %v169 = vshrl.u32 %v168, 7
    %v170 = vadd.s32 %v169, 8
    %v171 = vld [vmem:[#allocation2] sm:$0xf]
    %v172 = vld [vmem:[#allocation2 + $0x4] sm:$0xf]
    %v173 = vld [vmem:[#allocation2 + $0x8] sm:$0xf]
    %v174 = vld [vmem:[#allocation2 + $0xc] sm:$0xf]
    %v175 = vunpack.c.l.bf16 %v171
    %v176 = vunpack.c.l.bf16 %v172
    %v177 = vunpack.c.l.bf16 %v173
    %v178 = vunpack.c.l.bf16 %v174
    %v179 = vrot.slane %v175, 7
    %v180 = vrot.slane %v176, 7
    %v181 = vrot.slane %v177, 7
    %v182 = vrot.slane %v178, 7
    %vm183 = vcmp.lt.s32.totalorder %v169, 1
    %v184 = vsel %vm183, %v181, %v182
    %v185 = vsel %vm183, %v180, %v181
    %v186 = vsel %vm183, %v179, %v180
    %v187 = vsel %vm183, %v182, %v179
    %vm188 = vcmp.ge.s32.totalorder %v169, 1
    %vm189 = vcmp.ge.s32.totalorder %v170, 1
    %v190 = vsel %vm188, %v187, 0.0
    %v191 = vsel %vm189, %v186, 0.0
    %v192 = vsel %vm188, %v185, 0.0
    %v193 = vsel %vm189, %v184, 0.0
    %v194 = vpack.c.bf16 %v190, %v190
    %v195 = vpack.c.bf16 %v191, %v191
    %v196 = vpack.c.bf16 %v192, %v192
    %v197 = vpack.c.bf16 %v193, %v193
    %v202 = vunpack.c.l.b16 %v194
    %v203 = vunpack.c.l.b16 %v195
    %v204 = vunpack.c.l.b16 %v196
    %v205 = vunpack.c.l.b16 %v197
    %v206 = vpack.c.b16 %v203, %v202
    %v207 = vpack.c.b16 %v205, %v204
    %v214 = vunpack.c.l.b16 %v171
    %v215 = vunpack.c.l.b16 %v172
    %v216 = vunpack.c.l.b16 %v173
    %v217 = vunpack.c.l.b16 %v174
    %v218 = vpack.c.b16 %v215, %v214
    %v219 = vpack.c.b16 %v217, %v216
    %v222 = vld [vmem:[#allocation5] sm:$0xff]
    %v223 = vld [vmem:[#allocation5 + $0x8] sm:$0xff]
    %v224 = vld [vmem:[#allocation5 + $0x10] sm:$0xff]
    %v225 = vld [vmem:[#allocation5 + $0x18] sm:$0xff]
    %v226 = vld [vmem:[#allocation5 + $0x20] sm:$0xff]
    %v227 = vld [vmem:[#allocation5 + $0x28] sm:$0xff]
    %v228 = vld [vmem:[#allocation5 + $0x30] sm:$0xff]
    %v229 = vld [vmem:[#allocation5 + $0x38] sm:$0xff]
    %v230 = vld [vmem:[#allocation5 + $0x40] sm:$0xff]
    %v231 = vld [vmem:[#allocation5 + $0x48] sm:$0xff]
    %v232 = vld [vmem:[#allocation5 + $0x50] sm:$0xff]
    %v233 = vld [vmem:[#allocation5 + $0x58] sm:$0xff]
    %v234 = vld [vmem:[#allocation5 + $0x60] sm:$0xff]
    %v235 = vld [vmem:[#allocation5 + $0x68] sm:$0xff]
    %v236 = vld [vmem:[#allocation5 + $0x70] sm:$0xff]
    %v237 = vld [vmem:[#allocation5 + $0x78] sm:$0xff]
    %v238 = vld [vmem:[#allocation5 + $0x80] sm:$0xff]
    %v239 = vld [vmem:[#allocation5 + $0x88] sm:$0xff]
    %v240 = vld [vmem:[#allocation5 + $0x90] sm:$0xff]
    %v241 = vld [vmem:[#allocation5 + $0x98] sm:$0xff]
    %v242 = vld [vmem:[#allocation5 + $0xa0] sm:$0xff]
    %v243 = vld [vmem:[#allocation5 + $0xa8] sm:$0xff]
    %v244 = vld [vmem:[#allocation5 + $0xb0] sm:$0xff]
    %v245 = vld [vmem:[#allocation5 + $0xb8] sm:$0xff]
    %v246 = vld [vmem:[#allocation5 + $0xc0] sm:$0xff]
    %v247 = vld [vmem:[#allocation5 + $0xc8] sm:$0xff]
    %v248 = vld [vmem:[#allocation5 + $0xd0] sm:$0xff]
    %v249 = vld [vmem:[#allocation5 + $0xd8] sm:$0xff]
    %v250 = vld [vmem:[#allocation5 + $0xe0] sm:$0xff]
    %v251 = vld [vmem:[#allocation5 + $0xe8] sm:$0xff]
    %v252 = vld [vmem:[#allocation5 + $0xf0] sm:$0xff]
    %v253 = vld [vmem:[#allocation5 + $0xf8] sm:$0xff]
    %v254 = vld [vmem:[#allocation7] sm:$0x3]
    %v256 = vperm.slane %v254, 0
    %v257 = vperm.slane %v254, 1
    %v292 = vunpack.c.l.b16 %v222
    %v293 = vunpack.c.h.b16 %v222
    %v294 = vunpack.c.l.b16 %v223
    %v295 = vunpack.c.h.b16 %v223
    %v296 = vunpack.c.l.b16 %v224
    %v297 = vunpack.c.h.b16 %v224
    %v298 = vunpack.c.l.b16 %v225
    %v299 = vunpack.c.h.b16 %v225
    %v300 = vunpack.c.l.b16 %v226
    %v301 = vunpack.c.h.b16 %v226
    %v302 = vunpack.c.l.b16 %v227
    %v303 = vunpack.c.h.b16 %v227
    %v304 = vunpack.c.l.b16 %v228
    %v305 = vunpack.c.h.b16 %v228
    %v306 = vunpack.c.l.b16 %v229
    %v307 = vunpack.c.h.b16 %v229
    %v308 = vunpack.c.l.b16 %v230
    %v309 = vunpack.c.h.b16 %v230
    %v310 = vunpack.c.l.b16 %v231
    %v311 = vunpack.c.h.b16 %v231
    %v312 = vunpack.c.l.b16 %v232
    %v313 = vunpack.c.h.b16 %v232
    %v314 = vunpack.c.l.b16 %v233
    %v315 = vunpack.c.h.b16 %v233
    %v316 = vunpack.c.l.b16 %v234
    %v317 = vunpack.c.h.b16 %v234
    %v318 = vunpack.c.l.b16 %v235
    %v319 = vunpack.c.h.b16 %v235
    %v320 = vunpack.c.l.b16 %v236
    %v321 = vunpack.c.h.b16 %v236
    %v322 = vunpack.c.l.b16 %v237
    %v323 = vunpack.c.h.b16 %v237
    %v324 = vunpack.c.l.b16 %v238
    %v325 = vunpack.c.h.b16 %v238
    %v326 = vunpack.c.l.b16 %v239
    %v327 = vunpack.c.h.b16 %v239
    %v328 = vunpack.c.l.b16 %v240
    %v329 = vunpack.c.h.b16 %v240
    %v330 = vunpack.c.l.b16 %v241
    %v331 = vunpack.c.h.b16 %v241
    %v332 = vunpack.c.l.b16 %v242
    %v333 = vunpack.c.h.b16 %v242
    %v334 = vunpack.c.l.b16 %v243
    %v335 = vunpack.c.h.b16 %v243
    %v336 = vunpack.c.l.b16 %v244
    %v337 = vunpack.c.h.b16 %v244
    %v338 = vunpack.c.l.b16 %v245
    %v339 = vunpack.c.h.b16 %v245
    %v340 = vunpack.c.l.b16 %v246
    %v341 = vunpack.c.h.b16 %v246
    %v342 = vunpack.c.l.b16 %v247
    %v343 = vunpack.c.h.b16 %v247
    %v344 = vunpack.c.l.b16 %v248
    %v345 = vunpack.c.h.b16 %v248
    %v346 = vunpack.c.l.b16 %v249
    %v347 = vunpack.c.h.b16 %v249
    %v348 = vunpack.c.l.b16 %v250
    %v349 = vunpack.c.h.b16 %v250
    %v350 = vunpack.c.l.b16 %v251
    %v351 = vunpack.c.h.b16 %v251
    %v352 = vunpack.c.l.b16 %v252
    %v353 = vunpack.c.h.b16 %v252
    %v354 = vunpack.c.l.b16 %v253
    %v355 = vunpack.c.h.b16 %v253
    %v356 = vpack.c.b16 %v294, %v292
    %v357 = vpack.c.b16 %v295, %v293
    %v358 = vpack.c.b16 %v298, %v296
    %v359 = vpack.c.b16 %v299, %v297
    %v360 = vpack.c.b16 %v302, %v300
    %v361 = vpack.c.b16 %v303, %v301
    %v362 = vpack.c.b16 %v306, %v304
    %v363 = vpack.c.b16 %v307, %v305
    %v364 = vpack.c.b16 %v310, %v308
    %v365 = vpack.c.b16 %v311, %v309
    %v366 = vpack.c.b16 %v314, %v312
    %v367 = vpack.c.b16 %v315, %v313
    %v368 = vpack.c.b16 %v318, %v316
    %v369 = vpack.c.b16 %v319, %v317
    %v370 = vpack.c.b16 %v322, %v320
    %v371 = vpack.c.b16 %v323, %v321
    %v372 = vpack.c.b16 %v326, %v324
    %v373 = vpack.c.b16 %v327, %v325
    %v374 = vpack.c.b16 %v330, %v328
    %v375 = vpack.c.b16 %v331, %v329
    %v376 = vpack.c.b16 %v334, %v332
    %v377 = vpack.c.b16 %v335, %v333
    %v378 = vpack.c.b16 %v338, %v336
    %v379 = vpack.c.b16 %v339, %v337
    %v380 = vpack.c.b16 %v342, %v340
    %v381 = vpack.c.b16 %v343, %v341
    %v382 = vpack.c.b16 %v346, %v344
    %v383 = vpack.c.b16 %v347, %v345
    %v384 = vpack.c.b16 %v350, %v348
    %v385 = vpack.c.b16 %v351, %v349
    %v386 = vpack.c.b16 %v354, %v352
    %v387 = vpack.c.b16 %v355, %v353
    %420 = vmatpush.bf16.msra.mxu0 %v370
    %421 = vmatpush.bf16.msra.mxu0 %v368
    %422 = vmatpush.bf16.msra.mxu0 %v366
    %423 = vmatpush.bf16.msra.mxu0 %v364
    %424 = vmatpush.bf16.msra.mxu0 %v362
    %425 = vmatpush.bf16.msra.mxu0 %v360
    %426 = vmatpush.bf16.msra.mxu0 %v358
    %427 = vmatpush.bf16.msra.mxu0 %v356
    %428 = vmatmul.bf16.gmra.mxu0 %v206
    %v429 = vpop.f32.mrf.mxu0
    %v430 = vadd.f32 %v256, %v429
    %v431 = vpop.f32.mrf.mxu0
    %v432 = vadd.f32 %v256, %v431
    %433 = vmatmul.bf16.gmra.mxu0 %v207
    %v434 = vpop.f32.mrf.mxu0
    %v435 = vadd.f32 %v256, %v434
    %v436 = vpop.f32.mrf.mxu0
    %v437 = vadd.f32 %v256, %v436
    %438 = vdwg.mxu0
    %439 = vmatpush.bf16.msra.mxu0 %v386
    %440 = vmatpush.bf16.msra.mxu0 %v384
    %441 = vmatpush.bf16.msra.mxu0 %v382
    %442 = vmatpush.bf16.msra.mxu0 %v380
    %443 = vmatpush.bf16.msra.mxu0 %v378
    %444 = vmatpush.bf16.msra.mxu0 %v376
    %445 = vmatpush.bf16.msra.mxu0 %v374
    %446 = vmatpush.bf16.msra.mxu0 %v372
    %447 = vmatmul.bf16.gmra.mxu0 %v218
    %v448 = vpop.f32.mrf.mxu0
    %v449 = vadd.f32 %v430, %v448
    %v450 = vpop.f32.mrf.mxu0
    %v451 = vadd.f32 %v432, %v450
    %452 = vmatmul.bf16.gmra.mxu0 %v219
    %v453 = vpop.f32.mrf.mxu0
    %v454 = vadd.f32 %v435, %v453
    %v455 = vpop.f32.mrf.mxu0
    %v456 = vadd.f32 %v437, %v455
    %457 = vdwg.mxu0
    %458 = vmatpush.bf16.msra.mxu0 %v371
    %459 = vmatpush.bf16.msra.mxu0 %v369
    %460 = vmatpush.bf16.msra.mxu0 %v367
    %461 = vmatpush.bf16.msra.mxu0 %v365
    %462 = vmatpush.bf16.msra.mxu0 %v363
    %463 = vmatpush.bf16.msra.mxu0 %v361
    %464 = vmatpush.bf16.msra.mxu0 %v359
    %465 = vmatpush.bf16.msra.mxu0 %v357
    %466 = vmatmul.bf16.gmra.mxu0 %v206
    %v467 = vpop.f32.mrf.mxu0
    %v468 = vadd.f32 %v257, %v467
    %v469 = vpop.f32.mrf.mxu0
    %v470 = vadd.f32 %v257, %v469
    %471 = vmatmul.bf16.gmra.mxu0 %v207
    %v472 = vpop.f32.mrf.mxu0
    %v473 = vadd.f32 %v257, %v472
    %v474 = vpop.f32.mrf.mxu0
    %v475 = vadd.f32 %v257, %v474
    %476 = vdwg.mxu0
    %477 = vmatpush.bf16.msra.mxu0 %v387
    %478 = vmatpush.bf16.msra.mxu0 %v385
    %479 = vmatpush.bf16.msra.mxu0 %v383
    %480 = vmatpush.bf16.msra.mxu0 %v381
    %481 = vmatpush.bf16.msra.mxu0 %v379
    %482 = vmatpush.bf16.msra.mxu0 %v377
    %483 = vmatpush.bf16.msra.mxu0 %v375
    %484 = vmatpush.bf16.msra.mxu0 %v373
    %485 = vmatmul.bf16.gmra.mxu0 %v218
    %v486 = vpop.f32.mrf.mxu0
    %v487 = vadd.f32 %v468, %v486
    %v488 = vpop.f32.mrf.mxu0
    %v489 = vadd.f32 %v470, %v488
    %490 = vmatmul.bf16.gmra.mxu0 %v219
    %v491 = vpop.f32.mrf.mxu0
    %v492 = vadd.f32 %v473, %v491
    %v493 = vpop.f32.mrf.mxu0
    %v494 = vadd.f32 %v475, %v493
    %495 = vdwg.mxu0
    %v496 = vmax.f32 %v449, 0.0
    %v497 = vmax.f32 %v451, 0.0
    %v498 = vmax.f32 %v454, 0.0
    %v499 = vmax.f32 %v456, 0.0
    %v500 = vpack.c.bf16 %v496, %v496
    %v501 = vpack.c.bf16 %v497, %v497
    %v502 = vpack.c.bf16 %v498, %v498
    %v503 = vpack.c.bf16 %v499, %v499
    %v504 = vrot.slane %v496, 7
    %v505 = vrot.slane %v497, 7
    %v506 = vrot.slane %v498, 7
    %v507 = vrot.slane %v499, 7
    %v508 = vsel %vm183, %v506, %v507
    %v509 = vsel %vm183, %v505, %v506
    %v510 = vsel %vm183, %v504, %v505
    %v511 = vsel %vm183, %v507, %v504
    %v512 = vsel %vm188, %v511, 0.0
    %v513 = vsel %vm189, %v510, 0.0
    %v514 = vsel %vm188, %v509, 0.0
    %v515 = vsel %vm189, %v508, 0.0
    %v516 = vpack.c.bf16 %v512, %v512
    %v517 = vpack.c.bf16 %v513, %v513
    %v518 = vpack.c.bf16 %v514, %v514
    %v519 = vpack.c.bf16 %v515, %v515
    %v524 = vunpack.c.l.b16 %v516
    %v525 = vunpack.c.l.b16 %v517
    %v526 = vunpack.c.l.b16 %v518
    %v527 = vunpack.c.l.b16 %v519
    %v528 = vpack.c.b16 %v525, %v524
    %v529 = vpack.c.b16 %v527, %v526
    %v536 = vunpack.c.l.b16 %v500
    %v537 = vunpack.c.l.b16 %v501
    %v538 = vunpack.c.l.b16 %v502
    %v539 = vunpack.c.l.b16 %v503
    %v540 = vpack.c.b16 %v537, %v536
    %v541 = vpack.c.b16 %v539, %v538
    %v544 = vld [vmem:[#allocation8] sm:$0xf]
    %v545 = vld [vmem:[#allocation8 + $0x4] sm:$0xf]
    %v546 = vld [vmem:[#allocation8 + $0x8] sm:$0xf]
    %v547 = vld [vmem:[#allocation8 + $0xc] sm:$0xf]
    %v548 = vld [vmem:[#allocation8 + $0x10] sm:$0xf]
    %v549 = vld [vmem:[#allocation8 + $0x14] sm:$0xf]
    %v550 = vld [vmem:[#allocation8 + $0x18] sm:$0xf]
    %v551 = vld [vmem:[#allocation8 + $0x1c] sm:$0xf]
    %v552 = vld [vmem:[#allocation8 + $0x20] sm:$0xf]
    %v553 = vld [vmem:[#allocation8 + $0x24] sm:$0xf]
    %v554 = vld [vmem:[#allocation8 + $0x28] sm:$0xf]
    %v555 = vld [vmem:[#allocation8 + $0x2c] sm:$0xf]
    %v556 = vld [vmem:[#allocation8 + $0x30] sm:$0xf]
    %v557 = vld [vmem:[#allocation8 + $0x34] sm:$0xf]
    %v558 = vld [vmem:[#allocation8 + $0x38] sm:$0xf]
    %v559 = vld [vmem:[#allocation8 + $0x3c] sm:$0xf]
    %v560 = vld [vmem:[#allocation8 + $0x40] sm:$0xf]
    %v561 = vld [vmem:[#allocation8 + $0x44] sm:$0xf]
    %v562 = vld [vmem:[#allocation8 + $0x48] sm:$0xf]
    %v563 = vld [vmem:[#allocation8 + $0x4c] sm:$0xf]
    %v564 = vld [vmem:[#allocation8 + $0x50] sm:$0xf]
    %v565 = vld [vmem:[#allocation8 + $0x54] sm:$0xf]
    %v566 = vld [vmem:[#allocation8 + $0x58] sm:$0xf]
    %v567 = vld [vmem:[#allocation8 + $0x5c] sm:$0xf]
    %v568 = vld [vmem:[#allocation8 + $0x60] sm:$0xf]
    %v569 = vld [vmem:[#allocation8 + $0x64] sm:$0xf]
    %v570 = vld [vmem:[#allocation8 + $0x68] sm:$0xf]
    %v571 = vld [vmem:[#allocation8 + $0x6c] sm:$0xf]
    %v572 = vld [vmem:[#allocation8 + $0x70] sm:$0xf]
    %v573 = vld [vmem:[#allocation8 + $0x74] sm:$0xf]
    %v574 = vld [vmem:[#allocation8 + $0x78] sm:$0xf]
    %v575 = vld [vmem:[#allocation8 + $0x7c] sm:$0xf]
    %v576 = vld [vmem:[%s4] sm:$0x1]
    %v578 = vperm.slane %v576, 0
    %v612 = vunpack.c.l.b16 %v544
    %v613 = vunpack.c.l.b16 %v545
    %v614 = vunpack.c.l.b16 %v546
    %v615 = vunpack.c.l.b16 %v547
    %v616 = vunpack.c.l.b16 %v548
    %v617 = vunpack.c.l.b16 %v549
    %v618 = vunpack.c.l.b16 %v550
    %v619 = vunpack.c.l.b16 %v551
    %v620 = vunpack.c.l.b16 %v552
    %v621 = vunpack.c.l.b16 %v553
    %v622 = vunpack.c.l.b16 %v554
    %v623 = vunpack.c.l.b16 %v555
    %v624 = vunpack.c.l.b16 %v556
    %v625 = vunpack.c.l.b16 %v557
    %v626 = vunpack.c.l.b16 %v558
    %v627 = vunpack.c.l.b16 %v559
    %v628 = vunpack.c.l.b16 %v560
    %v629 = vunpack.c.l.b16 %v561
    %v630 = vunpack.c.l.b16 %v562
    %v631 = vunpack.c.l.b16 %v563
    %v632 = vunpack.c.l.b16 %v564
    %v633 = vunpack.c.l.b16 %v565
    %v634 = vunpack.c.l.b16 %v566
    %v635 = vunpack.c.l.b16 %v567
    %v636 = vunpack.c.l.b16 %v568
    %v637 = vunpack.c.l.b16 %v569
    %v638 = vunpack.c.l.b16 %v570
    %v639 = vunpack.c.l.b16 %v571
    %v640 = vunpack.c.l.b16 %v572
    %v641 = vunpack.c.l.b16 %v573
    %v642 = vunpack.c.l.b16 %v574
    %v643 = vunpack.c.l.b16 %v575
    %v644 = vpack.c.b16 %v613, %v612
    %v645 = vpack.c.b16 %v615, %v614
    %v646 = vpack.c.b16 %v617, %v616
    %v647 = vpack.c.b16 %v619, %v618
    %v648 = vpack.c.b16 %v621, %v620
    %v649 = vpack.c.b16 %v623, %v622
    %v650 = vpack.c.b16 %v625, %v624
    %v651 = vpack.c.b16 %v627, %v626
    %v652 = vpack.c.b16 %v629, %v628
    %v653 = vpack.c.b16 %v631, %v630
    %v654 = vpack.c.b16 %v633, %v632
    %v655 = vpack.c.b16 %v635, %v634
    %v656 = vpack.c.b16 %v637, %v636
    %v657 = vpack.c.b16 %v639, %v638
    %v658 = vpack.c.b16 %v641, %v640
    %v659 = vpack.c.b16 %v643, %v642
    %676 = vmatpush.bf16.msra.mxu0 %v651
    %677 = vmatpush.bf16.msra.mxu0 %v650
    %678 = vmatpush.bf16.msra.mxu0 %v649
    %679 = vmatpush.bf16.msra.mxu0 %v648
    %680 = vmatpush.bf16.msra.mxu0 %v647
    %681 = vmatpush.bf16.msra.mxu0 %v646
    %682 = vmatpush.bf16.msra.mxu0 %v645
    %683 = vmatpush.bf16.msra.mxu0 %v644
    %684 = vmatmul.bf16.gmra.mxu0 %v528
    %v685 = vpop.f32.mrf.mxu0
    %v686 = vadd.f32 %v578, %v685
    %v687 = vpop.f32.mrf.mxu0
    %v688 = vadd.f32 %v578, %v687
    %689 = vmatmul.bf16.gmra.mxu0 %v529
    %v690 = vpop.f32.mrf.mxu0
    %v691 = vadd.f32 %v578, %v690
    %v692 = vpop.f32.mrf.mxu0
    %v693 = vadd.f32 %v578, %v692
    %694 = vdwg.mxu0
    %695 = vmatpush.bf16.msra.mxu0 %v659
    %696 = vmatpush.bf16.msra.mxu0 %v658
    %697 = vmatpush.bf16.msra.mxu0 %v657
    %698 = vmatpush.bf16.msra.mxu0 %v656
    %699 = vmatpush.bf16.msra.mxu0 %v655
    %700 = vmatpush.bf16.msra.mxu0 %v654
    %701 = vmatpush.bf16.msra.mxu0 %v653
    %702 = vmatpush.bf16.msra.mxu0 %v652
    %703 = vmatmul.bf16.gmra.mxu0 %v540
    %v704 = vpop.f32.mrf.mxu0
    %v705 = vadd.f32 %v686, %v704
    %v706 = vpop.f32.mrf.mxu0
    %v707 = vadd.f32 %v688, %v706
    %708 = vmatmul.bf16.gmra.mxu0 %v541
    %v709 = vpop.f32.mrf.mxu0
    %v710 = vadd.f32 %v691, %v709
    %v711 = vpop.f32.mrf.mxu0
    %v712 = vadd.f32 %v693, %v711
    %713 = vdwg.mxu0
    %v714 = vmax.f32 %v705, 0.0
    %v715 = vmax.f32 %v707, 0.0
    %v716 = vmax.f32 %v710, 0.0
    %v717 = vmax.f32 %v712, 0.0
    %v718 = vadd.f32 %v714, %v487
    %v719 = vadd.f32 %v715, %v489
    %v720 = vadd.f32 %v716, %v492
    %v721 = vadd.f32 %v717, %v494
    %v722 = vmax.f32 %v718, 0.0
    %v723 = vmax.f32 %v719, 0.0
    %v724 = vmax.f32 %v720, 0.0
    %v725 = vmax.f32 %v721, 0.0
    %v726 = vpack.c.bf16 %v722, %v722
    %v727 = vpack.c.bf16 %v723, %v723
    %v728 = vpack.c.bf16 %v724, %v724
    %v729 = vpack.c.bf16 %v725, %v725
    %v730 = vrot.slane %v722, 6
    %v731 = vrot.slane %v723, 6
    %v732 = vrot.slane %v724, 6
    %v733 = vrot.slane %v725, 6
    %vm734 = vcmp.lt.s32.totalorder %v169, 2
    %v735 = vsel %vm734, %v732, %v733
    %v736 = vsel %vm734, %v731, %v732
    %v737 = vsel %vm734, %v730, %v731
    %v738 = vsel %vm734, %v733, %v730
    %vm739 = vcmp.ge.s32.totalorder %v169, 2
    %vm740 = vcmp.ge.s32.totalorder %v170, 2
    %v741 = vsel %vm739, %v738, 0.0
    %v742 = vsel %vm740, %v737, 0.0
    %v743 = vsel %vm739, %v736, 0.0
    %v744 = vsel %vm740, %v735, 0.0
    %v745 = vpack.c.bf16 %v741, %v741
    %v746 = vpack.c.bf16 %v742, %v742
    %v747 = vpack.c.bf16 %v743, %v743
    %v748 = vpack.c.bf16 %v744, %v744
    %v753 = vunpack.c.l.b16 %v745
    %v754 = vunpack.c.l.b16 %v746
    %v755 = vunpack.c.l.b16 %v747
    %v756 = vunpack.c.l.b16 %v748
    %v757 = vpack.c.b16 %v754, %v753
    %v758 = vpack.c.b16 %v756, %v755
    %v765 = vunpack.c.l.b16 %v726
    %v766 = vunpack.c.l.b16 %v727
    %v767 = vunpack.c.l.b16 %v728
    %v768 = vunpack.c.l.b16 %v729
    %v769 = vpack.c.b16 %v766, %v765
    %v770 = vpack.c.b16 %v768, %v767
    %v773 = vld [vmem:[#allocation10] sm:$0xf]
    %v774 = vld [vmem:[#allocation10 + $0x4] sm:$0xf]
    %v775 = vld [vmem:[#allocation10 + $0x8] sm:$0xf]
    %v776 = vld [vmem:[#allocation10 + $0xc] sm:$0xf]
    %v777 = vld [vmem:[#allocation10 + $0x10] sm:$0xf]
    %v778 = vld [vmem:[#allocation10 + $0x14] sm:$0xf]
    %v779 = vld [vmem:[#allocation10 + $0x18] sm:$0xf]
    %v780 = vld [vmem:[#allocation10 + $0x1c] sm:$0xf]
    %v781 = vld [vmem:[#allocation10 + $0x20] sm:$0xf]
    %v782 = vld [vmem:[#allocation10 + $0x24] sm:$0xf]
    %v783 = vld [vmem:[#allocation10 + $0x28] sm:$0xf]
    %v784 = vld [vmem:[#allocation10 + $0x2c] sm:$0xf]
    %v785 = vld [vmem:[#allocation10 + $0x30] sm:$0xf]
    %v786 = vld [vmem:[#allocation10 + $0x34] sm:$0xf]
    %v787 = vld [vmem:[#allocation10 + $0x38] sm:$0xf]
    %v788 = vld [vmem:[#allocation10 + $0x3c] sm:$0xf]
    %v789 = vld [vmem:[#allocation10 + $0x40] sm:$0xf]
    %v790 = vld [vmem:[#allocation10 + $0x44] sm:$0xf]
    %v791 = vld [vmem:[#allocation10 + $0x48] sm:$0xf]
    %v792 = vld [vmem:[#allocation10 + $0x4c] sm:$0xf]
    %v793 = vld [vmem:[#allocation10 + $0x50] sm:$0xf]
    %v794 = vld [vmem:[#allocation10 + $0x54] sm:$0xf]
    %v795 = vld [vmem:[#allocation10 + $0x58] sm:$0xf]
    %v796 = vld [vmem:[#allocation10 + $0x5c] sm:$0xf]
    %v797 = vld [vmem:[#allocation10 + $0x60] sm:$0xf]
    %v798 = vld [vmem:[#allocation10 + $0x64] sm:$0xf]
    %v799 = vld [vmem:[#allocation10 + $0x68] sm:$0xf]
    %v800 = vld [vmem:[#allocation10 + $0x6c] sm:$0xf]
    %v801 = vld [vmem:[#allocation10 + $0x70] sm:$0xf]
    %v802 = vld [vmem:[#allocation10 + $0x74] sm:$0xf]
    %v803 = vld [vmem:[#allocation10 + $0x78] sm:$0xf]
    %v804 = vld [vmem:[#allocation10 + $0x7c] sm:$0xf]
    %v805 = vld [vmem:[%s6] sm:$0x1]
    %v807 = vperm.slane %v805, 0
    %v841 = vunpack.c.l.b16 %v773
    %v842 = vunpack.c.l.b16 %v774
    %v843 = vunpack.c.l.b16 %v775
    %v844 = vunpack.c.l.b16 %v776
    %v845 = vunpack.c.l.b16 %v777
    %v846 = vunpack.c.l.b16 %v778
    %v847 = vunpack.c.l.b16 %v779
    %v848 = vunpack.c.l.b16 %v780
    %v849 = vunpack.c.l.b16 %v781
    %v850 = vunpack.c.l.b16 %v782
    %v851 = vunpack.c.l.b16 %v783
    %v852 = vunpack.c.l.b16 %v784
    %v853 = vunpack.c.l.b16 %v785
    %v854 = vunpack.c.l.b16 %v786
    %v855 = vunpack.c.l.b16 %v787
    %v856 = vunpack.c.l.b16 %v788
    %v857 = vunpack.c.l.b16 %v789
    %v858 = vunpack.c.l.b16 %v790
    %v859 = vunpack.c.l.b16 %v791
    %v860 = vunpack.c.l.b16 %v792
    %v861 = vunpack.c.l.b16 %v793
    %v862 = vunpack.c.l.b16 %v794
    %v863 = vunpack.c.l.b16 %v795
    %v864 = vunpack.c.l.b16 %v796
    %v865 = vunpack.c.l.b16 %v797
    %v866 = vunpack.c.l.b16 %v798
    %v867 = vunpack.c.l.b16 %v799
    %v868 = vunpack.c.l.b16 %v800
    %v869 = vunpack.c.l.b16 %v801
    %v870 = vunpack.c.l.b16 %v802
    %v871 = vunpack.c.l.b16 %v803
    %v872 = vunpack.c.l.b16 %v804
    %v873 = vpack.c.b16 %v842, %v841
    %v874 = vpack.c.b16 %v844, %v843
    %v875 = vpack.c.b16 %v846, %v845
    %v876 = vpack.c.b16 %v848, %v847
    %v877 = vpack.c.b16 %v850, %v849
    %v878 = vpack.c.b16 %v852, %v851
    %v879 = vpack.c.b16 %v854, %v853
    %v880 = vpack.c.b16 %v856, %v855
    %v881 = vpack.c.b16 %v858, %v857
    %v882 = vpack.c.b16 %v860, %v859
    %v883 = vpack.c.b16 %v862, %v861
    %v884 = vpack.c.b16 %v864, %v863
    %v885 = vpack.c.b16 %v866, %v865
    %v886 = vpack.c.b16 %v868, %v867
    %v887 = vpack.c.b16 %v870, %v869
    %v888 = vpack.c.b16 %v872, %v871
    %905 = vmatpush.bf16.msra.mxu0 %v880
    %906 = vmatpush.bf16.msra.mxu0 %v879
    %907 = vmatpush.bf16.msra.mxu0 %v878
    %908 = vmatpush.bf16.msra.mxu0 %v877
    %909 = vmatpush.bf16.msra.mxu0 %v876
    %910 = vmatpush.bf16.msra.mxu0 %v875
    %911 = vmatpush.bf16.msra.mxu0 %v874
    %912 = vmatpush.bf16.msra.mxu0 %v873
    %913 = vmatmul.bf16.gmra.mxu0 %v757
    %v914 = vpop.f32.mrf.mxu0
    %v915 = vadd.f32 %v807, %v914
    %v916 = vpop.f32.mrf.mxu0
    %v917 = vadd.f32 %v807, %v916
    %918 = vmatmul.bf16.gmra.mxu0 %v758
    %v919 = vpop.f32.mrf.mxu0
    %v920 = vadd.f32 %v807, %v919
    %v921 = vpop.f32.mrf.mxu0
    %v922 = vadd.f32 %v807, %v921
    %923 = vdwg.mxu0
    %924 = vmatpush.bf16.msra.mxu0 %v888
    %925 = vmatpush.bf16.msra.mxu0 %v887
    %926 = vmatpush.bf16.msra.mxu0 %v886
    %927 = vmatpush.bf16.msra.mxu0 %v885
    %928 = vmatpush.bf16.msra.mxu0 %v884
    %929 = vmatpush.bf16.msra.mxu0 %v883
    %930 = vmatpush.bf16.msra.mxu0 %v882
    %931 = vmatpush.bf16.msra.mxu0 %v881
    %932 = vmatmul.bf16.gmra.mxu0 %v769
    %v933 = vpop.f32.mrf.mxu0
    %v934 = vadd.f32 %v915, %v933
    %v935 = vpop.f32.mrf.mxu0
    %v936 = vadd.f32 %v917, %v935
    %937 = vmatmul.bf16.gmra.mxu0 %v770
    %v938 = vpop.f32.mrf.mxu0
    %v939 = vadd.f32 %v920, %v938
    %v940 = vpop.f32.mrf.mxu0
    %v941 = vadd.f32 %v922, %v940
    %942 = vdwg.mxu0
    %v943 = vmax.f32 %v934, 0.0
    %v944 = vmax.f32 %v936, 0.0
    %v945 = vmax.f32 %v939, 0.0
    %v946 = vmax.f32 %v941, 0.0
    %v947 = vpack.c.bf16 %v943, %v943
    %v948 = vpack.c.bf16 %v944, %v944
    %v949 = vpack.c.bf16 %v945, %v945
    %v950 = vpack.c.bf16 %v946, %v946
    %v951 = vrot.slane %v943, 6
    %v952 = vrot.slane %v944, 6
    %v953 = vrot.slane %v945, 6
    %v954 = vrot.slane %v946, 6
    %v955 = vsel %vm734, %v953, %v954
    %v956 = vsel %vm734, %v952, %v953
    %v957 = vsel %vm734, %v951, %v952
    %v958 = vsel %vm734, %v954, %v951
    %v959 = vsel %vm739, %v958, 0.0
    %v960 = vsel %vm740, %v957, 0.0
    %v961 = vsel %vm739, %v956, 0.0
    %v962 = vsel %vm740, %v955, 0.0
    %v963 = vpack.c.bf16 %v959, %v959
    %v964 = vpack.c.bf16 %v960, %v960
    %v965 = vpack.c.bf16 %v961, %v961
    %v966 = vpack.c.bf16 %v962, %v962
    %v971 = vunpack.c.l.b16 %v963
    %v972 = vunpack.c.l.b16 %v964
    %v973 = vunpack.c.l.b16 %v965
    %v974 = vunpack.c.l.b16 %v966
    %v975 = vpack.c.b16 %v972, %v971
    %v976 = vpack.c.b16 %v974, %v973
    %v983 = vunpack.c.l.b16 %v947
    %v984 = vunpack.c.l.b16 %v948
    %v985 = vunpack.c.l.b16 %v949
    %v986 = vunpack.c.l.b16 %v950
    %v987 = vpack.c.b16 %v984, %v983
    %v988 = vpack.c.b16 %v986, %v985
    %v991 = vld [vmem:[#allocation11] sm:$0xf]
    %v992 = vld [vmem:[#allocation11 + $0x4] sm:$0xf]
    %v993 = vld [vmem:[#allocation11 + $0x8] sm:$0xf]
    %v994 = vld [vmem:[#allocation11 + $0xc] sm:$0xf]
    %v995 = vld [vmem:[#allocation11 + $0x10] sm:$0xf]
    %v996 = vld [vmem:[#allocation11 + $0x14] sm:$0xf]
    %v997 = vld [vmem:[#allocation11 + $0x18] sm:$0xf]
    %v998 = vld [vmem:[#allocation11 + $0x1c] sm:$0xf]
    %v999 = vld [vmem:[#allocation11 + $0x20] sm:$0xf]
    %v1000 = vld [vmem:[#allocation11 + $0x24] sm:$0xf]
    %v1001 = vld [vmem:[#allocation11 + $0x28] sm:$0xf]
    %v1002 = vld [vmem:[#allocation11 + $0x2c] sm:$0xf]
    %v1003 = vld [vmem:[#allocation11 + $0x30] sm:$0xf]
    %v1004 = vld [vmem:[#allocation11 + $0x34] sm:$0xf]
    %v1005 = vld [vmem:[#allocation11 + $0x38] sm:$0xf]
    %v1006 = vld [vmem:[#allocation11 + $0x3c] sm:$0xf]
    %v1007 = vld [vmem:[#allocation11 + $0x40] sm:$0xf]
    %v1008 = vld [vmem:[#allocation11 + $0x44] sm:$0xf]
    %v1009 = vld [vmem:[#allocation11 + $0x48] sm:$0xf]
    %v1010 = vld [vmem:[#allocation11 + $0x4c] sm:$0xf]
    %v1011 = vld [vmem:[#allocation11 + $0x50] sm:$0xf]
    %v1012 = vld [vmem:[#allocation11 + $0x54] sm:$0xf]
    %v1013 = vld [vmem:[#allocation11 + $0x58] sm:$0xf]
    %v1014 = vld [vmem:[#allocation11 + $0x5c] sm:$0xf]
    %v1015 = vld [vmem:[#allocation11 + $0x60] sm:$0xf]
    %v1016 = vld [vmem:[#allocation11 + $0x64] sm:$0xf]
    %v1017 = vld [vmem:[#allocation11 + $0x68] sm:$0xf]
    %v1018 = vld [vmem:[#allocation11 + $0x6c] sm:$0xf]
    %v1019 = vld [vmem:[#allocation11 + $0x70] sm:$0xf]
    %v1020 = vld [vmem:[#allocation11 + $0x74] sm:$0xf]
    %v1021 = vld [vmem:[#allocation11 + $0x78] sm:$0xf]
    %v1022 = vld [vmem:[#allocation11 + $0x7c] sm:$0xf]
    %v1023 = vld [vmem:[%s8] sm:$0x1]
    %v1025 = vperm.slane %v1023, 0
    %v1059 = vunpack.c.l.b16 %v991
    %v1060 = vunpack.c.l.b16 %v992
    %v1061 = vunpack.c.l.b16 %v993
    %v1062 = vunpack.c.l.b16 %v994
    %v1063 = vunpack.c.l.b16 %v995
    %v1064 = vunpack.c.l.b16 %v996
    %v1065 = vunpack.c.l.b16 %v997
    %v1066 = vunpack.c.l.b16 %v998
    %v1067 = vunpack.c.l.b16 %v999
    %v1068 = vunpack.c.l.b16 %v1000
    %v1069 = vunpack.c.l.b16 %v1001
    %v1070 = vunpack.c.l.b16 %v1002
    %v1071 = vunpack.c.l.b16 %v1003
    %v1072 = vunpack.c.l.b16 %v1004
    %v1073 = vunpack.c.l.b16 %v1005
    %v1074 = vunpack.c.l.b16 %v1006
    %v1075 = vunpack.c.l.b16 %v1007
    %v1076 = vunpack.c.l.b16 %v1008
    %v1077 = vunpack.c.l.b16 %v1009
    %v1078 = vunpack.c.l.b16 %v1010
    %v1079 = vunpack.c.l.b16 %v1011
    %v1080 = vunpack.c.l.b16 %v1012
    %v1081 = vunpack.c.l.b16 %v1013
    %v1082 = vunpack.c.l.b16 %v1014
    %v1083 = vunpack.c.l.b16 %v1015
    %v1084 = vunpack.c.l.b16 %v1016
    %v1085 = vunpack.c.l.b16 %v1017
    %v1086 = vunpack.c.l.b16 %v1018
    %v1087 = vunpack.c.l.b16 %v1019
    %v1088 = vunpack.c.l.b16 %v1020
    %v1089 = vunpack.c.l.b16 %v1021
    %v1090 = vunpack.c.l.b16 %v1022
    %v1091 = vpack.c.b16 %v1060, %v1059
    %v1092 = vpack.c.b16 %v1062, %v1061
    %v1093 = vpack.c.b16 %v1064, %v1063
    %v1094 = vpack.c.b16 %v1066, %v1065
    %v1095 = vpack.c.b16 %v1068, %v1067
    %v1096 = vpack.c.b16 %v1070, %v1069
    %v1097 = vpack.c.b16 %v1072, %v1071
    %v1098 = vpack.c.b16 %v1074, %v1073
    %v1099 = vpack.c.b16 %v1076, %v1075
    %v1100 = vpack.c.b16 %v1078, %v1077
    %v1101 = vpack.c.b16 %v1080, %v1079
    %v1102 = vpack.c.b16 %v1082, %v1081
    %v1103 = vpack.c.b16 %v1084, %v1083
    %v1104 = vpack.c.b16 %v1086, %v1085
    %v1105 = vpack.c.b16 %v1088, %v1087
    %v1106 = vpack.c.b16 %v1090, %v1089
    %1123 = vmatpush.bf16.msra.mxu0 %v1098
    %1124 = vmatpush.bf16.msra.mxu0 %v1097
    %1125 = vmatpush.bf16.msra.mxu0 %v1096
    %1126 = vmatpush.bf16.msra.mxu0 %v1095
    %1127 = vmatpush.bf16.msra.mxu0 %v1094
    %1128 = vmatpush.bf16.msra.mxu0 %v1093
    %1129 = vmatpush.bf16.msra.mxu0 %v1092
    %1130 = vmatpush.bf16.msra.mxu0 %v1091
    %1131 = vmatmul.bf16.gmra.mxu0 %v975
    %v1132 = vpop.f32.mrf.mxu0
    %v1133 = vadd.f32 %v1025, %v1132
    %v1134 = vpop.f32.mrf.mxu0
    %v1135 = vadd.f32 %v1025, %v1134
    %1136 = vmatmul.bf16.gmra.mxu0 %v976
    %v1137 = vpop.f32.mrf.mxu0
    %v1138 = vadd.f32 %v1025, %v1137
    %v1139 = vpop.f32.mrf.mxu0
    %v1140 = vadd.f32 %v1025, %v1139
    %1141 = vdwg.mxu0
    %1142 = vmatpush.bf16.msra.mxu0 %v1106
    %1143 = vmatpush.bf16.msra.mxu0 %v1105
    %1144 = vmatpush.bf16.msra.mxu0 %v1104
    %1145 = vmatpush.bf16.msra.mxu0 %v1103
    %1146 = vmatpush.bf16.msra.mxu0 %v1102
    %1147 = vmatpush.bf16.msra.mxu0 %v1101
    %1148 = vmatpush.bf16.msra.mxu0 %v1100
    %1149 = vmatpush.bf16.msra.mxu0 %v1099
    %1150 = vmatmul.bf16.gmra.mxu0 %v987
    %v1151 = vpop.f32.mrf.mxu0
    %v1152 = vadd.f32 %v1133, %v1151
    %v1153 = vpop.f32.mrf.mxu0
    %v1154 = vadd.f32 %v1135, %v1153
    %1155 = vmatmul.bf16.gmra.mxu0 %v988
    %v1156 = vpop.f32.mrf.mxu0
    %v1157 = vadd.f32 %v1138, %v1156
    %v1158 = vpop.f32.mrf.mxu0
    %v1159 = vadd.f32 %v1140, %v1158
    %1160 = vdwg.mxu0
    %v1161 = vmax.f32 %v1152, 0.0
    %v1162 = vmax.f32 %v1154, 0.0
    %v1163 = vmax.f32 %v1157, 0.0
    %v1164 = vmax.f32 %v1159, 0.0
    %v1165 = vunpack.c.l.bf16 %v726
    %v1166 = vunpack.c.l.bf16 %v727
    %v1167 = vunpack.c.l.bf16 %v728
    %v1168 = vunpack.c.l.bf16 %v729
    %v1169 = vadd.f32 %v1161, %v1165
    %v1170 = vadd.f32 %v1162, %v1166
    %v1171 = vadd.f32 %v1163, %v1167
    %v1172 = vadd.f32 %v1164, %v1168
    %v1173 = vmax.f32 %v1169, 0.0
    %v1174 = vmax.f32 %v1170, 0.0
    %v1175 = vmax.f32 %v1171, 0.0
    %v1176 = vmax.f32 %v1172, 0.0
    %v1177 = vpack.c.bf16 %v1173, %v1173
    %v1178 = vpack.c.bf16 %v1174, %v1174
    %v1179 = vpack.c.bf16 %v1175, %v1175
    %v1180 = vpack.c.bf16 %v1176, %v1176
    %v1181 = vrot.slane %v1173, 4
    %v1182 = vrot.slane %v1174, 4
    %v1183 = vrot.slane %v1175, 4
    %v1184 = vrot.slane %v1176, 4
    %vm1185 = vcmp.lt.s32.totalorder %v169, 4
    %v1186 = vsel %vm1185, %v1183, %v1184
    %v1187 = vsel %vm1185, %v1182, %v1183
    %v1188 = vsel %vm1185, %v1181, %v1182
    %v1189 = vsel %vm1185, %v1184, %v1181
    %vm1190 = vcmp.ge.s32.totalorder %v169, 4
    %vm1191 = vcmp.ge.s32.totalorder %v170, 4
    %v1192 = vsel %vm1190, %v1189, 0.0
    %v1193 = vsel %vm1191, %v1188, 0.0
    %v1194 = vsel %vm1190, %v1187, 0.0
    %v1195 = vsel %vm1191, %v1186, 0.0
    %v1196 = vpack.c.bf16 %v1192, %v1192
    %v1197 = vpack.c.bf16 %v1193, %v1193
    %v1198 = vpack.c.bf16 %v1194, %v1194
    %v1199 = vpack.c.bf16 %v1195, %v1195
    %v1204 = vunpack.c.l.b16 %v1196
    %v1205 = vunpack.c.l.b16 %v1197
    %v1206 = vunpack.c.l.b16 %v1198
    %v1207 = vunpack.c.l.b16 %v1199
    %v1208 = vpack.c.b16 %v1205, %v1204
    %v1209 = vpack.c.b16 %v1207, %v1206
    %v1216 = vunpack.c.l.b16 %v1177
    %v1217 = vunpack.c.l.b16 %v1178
    %v1218 = vunpack.c.l.b16 %v1179
    %v1219 = vunpack.c.l.b16 %v1180
    %v1220 = vpack.c.b16 %v1217, %v1216
    %v1221 = vpack.c.b16 %v1219, %v1218
    %v1224 = vld [vmem:[#allocation13] sm:$0xff]
    %v1225 = vld [vmem:[#allocation13 + $0x8] sm:$0xff]
    %v1226 = vld [vmem:[#allocation13 + $0x10] sm:$0xff]
    %v1227 = vld [vmem:[#allocation13 + $0x18] sm:$0xff]
    %v1228 = vld [vmem:[#allocation13 + $0x20] sm:$0xff]
    %v1229 = vld [vmem:[#allocation13 + $0x28] sm:$0xff]
    %v1230 = vld [vmem:[#allocation13 + $0x30] sm:$0xff]
    %v1231 = vld [vmem:[#allocation13 + $0x38] sm:$0xff]
    %v1232 = vld [vmem:[#allocation13 + $0x40] sm:$0xff]
    %v1233 = vld [vmem:[#allocation13 + $0x48] sm:$0xff]
    %v1234 = vld [vmem:[#allocation13 + $0x50] sm:$0xff]
    %v1235 = vld [vmem:[#allocation13 + $0x58] sm:$0xff]
    %v1236 = vld [vmem:[#allocation13 + $0x60] sm:$0xff]
    %v1237 = vld [vmem:[#allocation13 + $0x68] sm:$0xff]
    %v1238 = vld [vmem:[#allocation13 + $0x70] sm:$0xff]
    %v1239 = vld [vmem:[#allocation13 + $0x78] sm:$0xff]
    %v1240 = vld [vmem:[#allocation13 + $0x80] sm:$0xff]
    %v1241 = vld [vmem:[#allocation13 + $0x88] sm:$0xff]
    %v1242 = vld [vmem:[#allocation13 + $0x90] sm:$0xff]
    %v1243 = vld [vmem:[#allocation13 + $0x98] sm:$0xff]
    %v1244 = vld [vmem:[#allocation13 + $0xa0] sm:$0xff]
    %v1245 = vld [vmem:[#allocation13 + $0xa8] sm:$0xff]
    %v1246 = vld [vmem:[#allocation13 + $0xb0] sm:$0xff]
    %v1247 = vld [vmem:[#allocation13 + $0xb8] sm:$0xff]
    %v1248 = vld [vmem:[#allocation13 + $0xc0] sm:$0xff]
    %v1249 = vld [vmem:[#allocation13 + $0xc8] sm:$0xff]
    %v1250 = vld [vmem:[#allocation13 + $0xd0] sm:$0xff]
    %v1251 = vld [vmem:[#allocation13 + $0xd8] sm:$0xff]
    %v1252 = vld [vmem:[#allocation13 + $0xe0] sm:$0xff]
    %v1253 = vld [vmem:[#allocation13 + $0xe8] sm:$0xff]
    %v1254 = vld [vmem:[#allocation13 + $0xf0] sm:$0xff]
    %v1255 = vld [vmem:[#allocation13 + $0xf8] sm:$0xff]
    %v1256 = vld [vmem:[%s10] sm:$0x3]
    %v1258 = vperm.slane %v1256, 0
    %v1259 = vperm.slane %v1256, 1
    %v1294 = vunpack.c.l.b16 %v1224
    %v1295 = vunpack.c.h.b16 %v1224
    %v1296 = vunpack.c.l.b16 %v1225
    %v1297 = vunpack.c.h.b16 %v1225
    %v1298 = vunpack.c.l.b16 %v1226
    %v1299 = vunpack.c.h.b16 %v1226
    %v1300 = vunpack.c.l.b16 %v1227
    %v1301 = vunpack.c.h.b16 %v1227
    %v1302 = vunpack.c.l.b16 %v1228
    %v1303 = vunpack.c.h.b16 %v1228
    %v1304 = vunpack.c.l.b16 %v1229
    %v1305 = vunpack.c.h.b16 %v1229
    %v1306 = vunpack.c.l.b16 %v1230
    %v1307 = vunpack.c.h.b16 %v1230
    %v1308 = vunpack.c.l.b16 %v1231
    %v1309 = vunpack.c.h.b16 %v1231
    %v1310 = vunpack.c.l.b16 %v1232
    %v1311 = vunpack.c.h.b16 %v1232
    %v1312 = vunpack.c.l.b16 %v1233
    %v1313 = vunpack.c.h.b16 %v1233
    %v1314 = vunpack.c.l.b16 %v1234
    %v1315 = vunpack.c.h.b16 %v1234
    %v1316 = vunpack.c.l.b16 %v1235
    %v1317 = vunpack.c.h.b16 %v1235
    %v1318 = vunpack.c.l.b16 %v1236
    %v1319 = vunpack.c.h.b16 %v1236
    %v1320 = vunpack.c.l.b16 %v1237
    %v1321 = vunpack.c.h.b16 %v1237
    %v1322 = vunpack.c.l.b16 %v1238
    %v1323 = vunpack.c.h.b16 %v1238
    %v1324 = vunpack.c.l.b16 %v1239
    %v1325 = vunpack.c.h.b16 %v1239
    %v1326 = vunpack.c.l.b16 %v1240
    %v1327 = vunpack.c.h.b16 %v1240
    %v1328 = vunpack.c.l.b16 %v1241
    %v1329 = vunpack.c.h.b16 %v1241
    %v1330 = vunpack.c.l.b16 %v1242
    %v1331 = vunpack.c.h.b16 %v1242
    %v1332 = vunpack.c.l.b16 %v1243
    %v1333 = vunpack.c.h.b16 %v1243
    %v1334 = vunpack.c.l.b16 %v1244
    %v1335 = vunpack.c.h.b16 %v1244
    %v1336 = vunpack.c.l.b16 %v1245
    %v1337 = vunpack.c.h.b16 %v1245
    %v1338 = vunpack.c.l.b16 %v1246
    %v1339 = vunpack.c.h.b16 %v1246
    %v1340 = vunpack.c.l.b16 %v1247
    %v1341 = vunpack.c.h.b16 %v1247
    %v1342 = vunpack.c.l.b16 %v1248
    %v1343 = vunpack.c.h.b16 %v1248
    %v1344 = vunpack.c.l.b16 %v1249
    %v1345 = vunpack.c.h.b16 %v1249
    %v1346 = vunpack.c.l.b16 %v1250
    %v1347 = vunpack.c.h.b16 %v1250
    %v1348 = vunpack.c.l.b16 %v1251
    %v1349 = vunpack.c.h.b16 %v1251
    %v1350 = vunpack.c.l.b16 %v1252
    %v1351 = vunpack.c.h.b16 %v1252
    %v1352 = vunpack.c.l.b16 %v1253
    %v1353 = vunpack.c.h.b16 %v1253
    %v1354 = vunpack.c.l.b16 %v1254
    %v1355 = vunpack.c.h.b16 %v1254
    %v1356 = vunpack.c.l.b16 %v1255
    %v1357 = vunpack.c.h.b16 %v1255
    %v1358 = vpack.c.b16 %v1296, %v1294
    %v1359 = vpack.c.b16 %v1297, %v1295
    %v1360 = vpack.c.b16 %v1300, %v1298
    %v1361 = vpack.c.b16 %v1301, %v1299
    %v1362 = vpack.c.b16 %v1304, %v1302
    %v1363 = vpack.c.b16 %v1305, %v1303
    %v1364 = vpack.c.b16 %v1308, %v1306
    %v1365 = vpack.c.b16 %v1309, %v1307
    %v1366 = vpack.c.b16 %v1312, %v1310
    %v1367 = vpack.c.b16 %v1313, %v1311
    %v1368 = vpack.c.b16 %v1316, %v1314
    %v1369 = vpack.c.b16 %v1317, %v1315
    %v1370 = vpack.c.b16 %v1320, %v1318
    %v1371 = vpack.c.b16 %v1321, %v1319
    %v1372 = vpack.c.b16 %v1324, %v1322
    %v1373 = vpack.c.b16 %v1325, %v1323
    %v1374 = vpack.c.b16 %v1328, %v1326
    %v1375 = vpack.c.b16 %v1329, %v1327
    %v1376 = vpack.c.b16 %v1332, %v1330
    %v1377 = vpack.c.b16 %v1333, %v1331
    %v1378 = vpack.c.b16 %v1336, %v1334
    %v1379 = vpack.c.b16 %v1337, %v1335
    %v1380 = vpack.c.b16 %v1340, %v1338
    %v1381 = vpack.c.b16 %v1341, %v1339
    %v1382 = vpack.c.b16 %v1344, %v1342
    %v1383 = vpack.c.b16 %v1345, %v1343
    %v1384 = vpack.c.b16 %v1348, %v1346
    %v1385 = vpack.c.b16 %v1349, %v1347
    %v1386 = vpack.c.b16 %v1352, %v1350
    %v1387 = vpack.c.b16 %v1353, %v1351
    %v1388 = vpack.c.b16 %v1356, %v1354
    %v1389 = vpack.c.b16 %v1357, %v1355
    %1422 = vmatpush.bf16.msra.mxu0 %v1372
    %1423 = vmatpush.bf16.msra.mxu0 %v1370
    %1424 = vmatpush.bf16.msra.mxu0 %v1368
    %1425 = vmatpush.bf16.msra.mxu0 %v1366
    %1426 = vmatpush.bf16.msra.mxu0 %v1364
    %1427 = vmatpush.bf16.msra.mxu0 %v1362
    %1428 = vmatpush.bf16.msra.mxu0 %v1360
    %1429 = vmatpush.bf16.msra.mxu0 %v1358
    %1430 = vmatmul.bf16.gmra.mxu0 %v1208
    %v1431 = vpop.f32.mrf.mxu0
    %v1432 = vadd.f32 %v1258, %v1431
    %v1433 = vpop.f32.mrf.mxu0
    %v1434 = vadd.f32 %v1258, %v1433
    %1435 = vmatmul.bf16.gmra.mxu0 %v1209
    %v1436 = vpop.f32.mrf.mxu0
    %v1437 = vadd.f32 %v1258, %v1436
    %v1438 = vpop.f32.mrf.mxu0
    %v1439 = vadd.f32 %v1258, %v1438
    %1440 = vdwg.mxu0
    %1441 = vmatpush.bf16.msra.mxu0 %v1388
    %1442 = vmatpush.bf16.msra.mxu0 %v1386
    %1443 = vmatpush.bf16.msra.mxu0 %v1384
    %1444 = vmatpush.bf16.msra.mxu0 %v1382
    %1445 = vmatpush.bf16.msra.mxu0 %v1380
    %1446 = vmatpush.bf16.msra.mxu0 %v1378
    %1447 = vmatpush.bf16.msra.mxu0 %v1376
    %1448 = vmatpush.bf16.msra.mxu0 %v1374
    %1449 = vmatmul.bf16.gmra.mxu0 %v1220
    %v1450 = vpop.f32.mrf.mxu0
    %v1451 = vadd.f32 %v1432, %v1450
    %v1452 = vpop.f32.mrf.mxu0
    %v1453 = vadd.f32 %v1434, %v1452
    %1454 = vmatmul.bf16.gmra.mxu0 %v1221
    %v1455 = vpop.f32.mrf.mxu0
    %v1456 = vadd.f32 %v1437, %v1455
    %v1457 = vpop.f32.mrf.mxu0
    %v1458 = vadd.f32 %v1439, %v1457
    %1459 = vdwg.mxu0
    %1460 = vmatpush.bf16.msra.mxu0 %v1373
    %1461 = vmatpush.bf16.msra.mxu0 %v1371
    %1462 = vmatpush.bf16.msra.mxu0 %v1369
    %1463 = vmatpush.bf16.msra.mxu0 %v1367
    %1464 = vmatpush.bf16.msra.mxu0 %v1365
    %1465 = vmatpush.bf16.msra.mxu0 %v1363
    %1466 = vmatpush.bf16.msra.mxu0 %v1361
    %1467 = vmatpush.bf16.msra.mxu0 %v1359
    %1468 = vmatmul.bf16.gmra.mxu0 %v1208
    %v1469 = vpop.f32.mrf.mxu0
    %v1470 = vadd.f32 %v1259, %v1469
    %v1471 = vpop.f32.mrf.mxu0
    %v1472 = vadd.f32 %v1259, %v1471
    %1473 = vmatmul.bf16.gmra.mxu0 %v1209
    %v1474 = vpop.f32.mrf.mxu0
    %v1475 = vadd.f32 %v1259, %v1474
    %v1476 = vpop.f32.mrf.mxu0
    %v1477 = vadd.f32 %v1259, %v1476
    %1478 = vdwg.mxu0
    %1479 = vmatpush.bf16.msra.mxu0 %v1389
    %1480 = vmatpush.bf16.msra.mxu0 %v1387
    %1481 = vmatpush.bf16.msra.mxu0 %v1385
    %1482 = vmatpush.bf16.msra.mxu0 %v1383
    %1483 = vmatpush.bf16.msra.mxu0 %v1381
    %1484 = vmatpush.bf16.msra.mxu0 %v1379
    %1485 = vmatpush.bf16.msra.mxu0 %v1377
    %1486 = vmatpush.bf16.msra.mxu0 %v1375
    %1487 = vmatmul.bf16.gmra.mxu0 %v1220
    %v1488 = vpop.f32.mrf.mxu0
    %v1489 = vadd.f32 %v1470, %v1488
    %v1490 = vpop.f32.mrf.mxu0
    %v1491 = vadd.f32 %v1472, %v1490
    %1492 = vmatmul.bf16.gmra.mxu0 %v1221
    %v1493 = vpop.f32.mrf.mxu0
    %v1494 = vadd.f32 %v1475, %v1493
    %v1495 = vpop.f32.mrf.mxu0
    %v1496 = vadd.f32 %v1477, %v1495
    %1497 = vdwg.mxu0
    %v1498 = vmax.f32 %v1451, 0.0
    %v1499 = vmax.f32 %v1453, 0.0
    %v1500 = vmax.f32 %v1456, 0.0
    %v1501 = vmax.f32 %v1458, 0.0
    %v1502 = vpack.c.bf16 %v1498, %v1498
    %v1503 = vpack.c.bf16 %v1499, %v1499
    %v1504 = vpack.c.bf16 %v1500, %v1500
    %v1505 = vpack.c.bf16 %v1501, %v1501
    %v1506 = vrot.slane %v1498, 4
    %v1507 = vrot.slane %v1499, 4
    %v1508 = vrot.slane %v1500, 4
    %v1509 = vrot.slane %v1501, 4
    %v1510 = vsel %vm1185, %v1508, %v1509
    %v1511 = vsel %vm1185, %v1507, %v1508
    %v1512 = vsel %vm1185, %v1506, %v1507
    %v1513 = vsel %vm1185, %v1509, %v1506
    %v1514 = vsel %vm1190, %v1513, 0.0
    %v1515 = vsel %vm1191, %v1512, 0.0
    %v1516 = vsel %vm1190, %v1511, 0.0
    %v1517 = vsel %vm1191, %v1510, 0.0
    %v1518 = vpack.c.bf16 %v1514, %v1514
    %v1519 = vpack.c.bf16 %v1515, %v1515
    %v1520 = vpack.c.bf16 %v1516, %v1516
    %v1521 = vpack.c.bf16 %v1517, %v1517
    %v1526 = vunpack.c.l.b16 %v1518
    %v1527 = vunpack.c.l.b16 %v1519
    %v1528 = vunpack.c.l.b16 %v1520
    %v1529 = vunpack.c.l.b16 %v1521
    %v1530 = vpack.c.b16 %v1527, %v1526
    %v1531 = vpack.c.b16 %v1529, %v1528
    %v1538 = vunpack.c.l.b16 %v1502
    %v1539 = vunpack.c.l.b16 %v1503
    %v1540 = vunpack.c.l.b16 %v1504
    %v1541 = vunpack.c.l.b16 %v1505
    %v1542 = vpack.c.b16 %v1539, %v1538
    %v1543 = vpack.c.b16 %v1541, %v1540
    %v1546 = vld [vmem:[#allocation14] sm:$0xf]
    %v1547 = vld [vmem:[#allocation14 + $0x4] sm:$0xf]
    %v1548 = vld [vmem:[#allocation14 + $0x8] sm:$0xf]
    %v1549 = vld [vmem:[#allocation14 + $0xc] sm:$0xf]
    %v1550 = vld [vmem:[#allocation14 + $0x10] sm:$0xf]
    %v1551 = vld [vmem:[#allocation14 + $0x14] sm:$0xf]
    %v1552 = vld [vmem:[#allocation14 + $0x18] sm:$0xf]
    %v1553 = vld [vmem:[#allocation14 + $0x1c] sm:$0xf]
    %v1554 = vld [vmem:[#allocation14 + $0x20] sm:$0xf]
    %v1555 = vld [vmem:[#allocation14 + $0x24] sm:$0xf]
    %v1556 = vld [vmem:[#allocation14 + $0x28] sm:$0xf]
    %v1557 = vld [vmem:[#allocation14 + $0x2c] sm:$0xf]
    %v1558 = vld [vmem:[#allocation14 + $0x30] sm:$0xf]
    %v1559 = vld [vmem:[#allocation14 + $0x34] sm:$0xf]
    %v1560 = vld [vmem:[#allocation14 + $0x38] sm:$0xf]
    %v1561 = vld [vmem:[#allocation14 + $0x3c] sm:$0xf]
    %v1562 = vld [vmem:[#allocation14 + $0x40] sm:$0xf]
    %v1563 = vld [vmem:[#allocation14 + $0x44] sm:$0xf]
    %v1564 = vld [vmem:[#allocation14 + $0x48] sm:$0xf]
    %v1565 = vld [vmem:[#allocation14 + $0x4c] sm:$0xf]
    %v1566 = vld [vmem:[#allocation14 + $0x50] sm:$0xf]
    %v1567 = vld [vmem:[#allocation14 + $0x54] sm:$0xf]
    %v1568 = vld [vmem:[#allocation14 + $0x58] sm:$0xf]
    %v1569 = vld [vmem:[#allocation14 + $0x5c] sm:$0xf]
    %v1570 = vld [vmem:[#allocation14 + $0x60] sm:$0xf]
    %v1571 = vld [vmem:[#allocation14 + $0x64] sm:$0xf]
    %v1572 = vld [vmem:[#allocation14 + $0x68] sm:$0xf]
    %v1573 = vld [vmem:[#allocation14 + $0x6c] sm:$0xf]
    %v1574 = vld [vmem:[#allocation14 + $0x70] sm:$0xf]
    %v1575 = vld [vmem:[#allocation14 + $0x74] sm:$0xf]
    %v1576 = vld [vmem:[#allocation14 + $0x78] sm:$0xf]
    %v1577 = vld [vmem:[#allocation14 + $0x7c] sm:$0xf]
    %v1578 = vld [vmem:[%s12] sm:$0x1]
    %v1580 = vperm.slane %v1578, 0
    %v1614 = vunpack.c.l.b16 %v1546
    %v1615 = vunpack.c.l.b16 %v1547
    %v1616 = vunpack.c.l.b16 %v1548
    %v1617 = vunpack.c.l.b16 %v1549
    %v1618 = vunpack.c.l.b16 %v1550
    %v1619 = vunpack.c.l.b16 %v1551
    %v1620 = vunpack.c.l.b16 %v1552
    %v1621 = vunpack.c.l.b16 %v1553
    %v1622 = vunpack.c.l.b16 %v1554
    %v1623 = vunpack.c.l.b16 %v1555
    %v1624 = vunpack.c.l.b16 %v1556
    %v1625 = vunpack.c.l.b16 %v1557
    %v1626 = vunpack.c.l.b16 %v1558
    %v1627 = vunpack.c.l.b16 %v1559
    %v1628 = vunpack.c.l.b16 %v1560
    %v1629 = vunpack.c.l.b16 %v1561
    %v1630 = vunpack.c.l.b16 %v1562
    %v1631 = vunpack.c.l.b16 %v1563
    %v1632 = vunpack.c.l.b16 %v1564
    %v1633 = vunpack.c.l.b16 %v1565
    %v1634 = vunpack.c.l.b16 %v1566
    %v1635 = vunpack.c.l.b16 %v1567
    %v1636 = vunpack.c.l.b16 %v1568
    %v1637 = vunpack.c.l.b16 %v1569
    %v1638 = vunpack.c.l.b16 %v1570
    %v1639 = vunpack.c.l.b16 %v1571
    %v1640 = vunpack.c.l.b16 %v1572
    %v1641 = vunpack.c.l.b16 %v1573
    %v1642 = vunpack.c.l.b16 %v1574
    %v1643 = vunpack.c.l.b16 %v1575
    %v1644 = vunpack.c.l.b16 %v1576
    %v1645 = vunpack.c.l.b16 %v1577
    %v1646 = vpack.c.b16 %v1615, %v1614
    %v1647 = vpack.c.b16 %v1617, %v1616
    %v1648 = vpack.c.b16 %v1619, %v1618
    %v1649 = vpack.c.b16 %v1621, %v1620
    %v1650 = vpack.c.b16 %v1623, %v1622
    %v1651 = vpack.c.b16 %v1625, %v1624
    %v1652 = vpack.c.b16 %v1627, %v1626
    %v1653 = vpack.c.b16 %v1629, %v1628
    %v1654 = vpack.c.b16 %v1631, %v1630
    %v1655 = vpack.c.b16 %v1633, %v1632
    %v1656 = vpack.c.b16 %v1635, %v1634
    %v1657 = vpack.c.b16 %v1637, %v1636
    %v1658 = vpack.c.b16 %v1639, %v1638
    %v1659 = vpack.c.b16 %v1641, %v1640
    %v1660 = vpack.c.b16 %v1643, %v1642
    %v1661 = vpack.c.b16 %v1645, %v1644
    %1678 = vmatpush.bf16.msra.mxu0 %v1653
    %1679 = vmatpush.bf16.msra.mxu0 %v1652
    %1680 = vmatpush.bf16.msra.mxu0 %v1651
    %1681 = vmatpush.bf16.msra.mxu0 %v1650
    %1682 = vmatpush.bf16.msra.mxu0 %v1649
    %1683 = vmatpush.bf16.msra.mxu0 %v1648
    %1684 = vmatpush.bf16.msra.mxu0 %v1647
    %1685 = vmatpush.bf16.msra.mxu0 %v1646
    %1686 = vmatmul.bf16.gmra.mxu0 %v1530
    %v1687 = vpop.f32.mrf.mxu0
    %v1688 = vadd.f32 %v1580, %v1687
    %v1689 = vpop.f32.mrf.mxu0
    %v1690 = vadd.f32 %v1580, %v1689
    %1691 = vmatmul.bf16.gmra.mxu0 %v1531
    %v1692 = vpop.f32.mrf.mxu0
    %v1693 = vadd.f32 %v1580, %v1692
    %v1694 = vpop.f32.mrf.mxu0
    %v1695 = vadd.f32 %v1580, %v1694
    %1696 = vdwg.mxu0
    %1697 = vmatpush.bf16.msra.mxu0 %v1661
    %1698 = vmatpush.bf16.msra.mxu0 %v1660
    %1699 = vmatpush.bf16.msra.mxu0 %v1659
    %1700 = vmatpush.bf16.msra.mxu0 %v1658
    %1701 = vmatpush.bf16.msra.mxu0 %v1657
    %1702 = vmatpush.bf16.msra.mxu0 %v1656
    %1703 = vmatpush.bf16.msra.mxu0 %v1655
    %1704 = vmatpush.bf16.msra.mxu0 %v1654
    %1705 = vmatmul.bf16.gmra.mxu0 %v1542
    %v1706 = vpop.f32.mrf.mxu0
    %v1707 = vadd.f32 %v1688, %v1706
    %v1708 = vpop.f32.mrf.mxu0
    %v1709 = vadd.f32 %v1690, %v1708
    %1710 = vmatmul.bf16.gmra.mxu0 %v1543
    %v1711 = vpop.f32.mrf.mxu0
    %v1712 = vadd.f32 %v1693, %v1711
    %v1713 = vpop.f32.mrf.mxu0
    %v1714 = vadd.f32 %v1695, %v1713
    %1715 = vdwg.mxu0
    %v1716 = vmax.f32 %v1707, 0.0
    %v1717 = vmax.f32 %v1709, 0.0
    %v1718 = vmax.f32 %v1712, 0.0
    %v1719 = vmax.f32 %v1714, 0.0
    %v1720 = vadd.f32 %v1716, %v1489
    %v1721 = vadd.f32 %v1717, %v1491
    %v1722 = vadd.f32 %v1718, %v1494
    %v1723 = vadd.f32 %v1719, %v1496
    %v1724 = vmax.f32 %v1720, 0.0
    %v1725 = vmax.f32 %v1721, 0.0
    %v1726 = vmax.f32 %v1722, 0.0
    %v1727 = vmax.f32 %v1723, 0.0
    %v1728 = vpack.c.bf16 %v1724, %v1724
    %v1729 = vpack.c.bf16 %v1725, %v1725
    %v1730 = vpack.c.bf16 %v1726, %v1726
    %v1731 = vpack.c.bf16 %v1727, %v1727
    %1732 = vst [vmem:[#allocation16] sm:$0xf] %v1728
    %1733 = vst [vmem:[#allocation16 + $0x4] sm:$0xf] %v1729
    %1734 = vst [vmem:[#allocation16 + $0x8] sm:$0xf] %v1730
    %1735 = vst [vmem:[#allocation16 + $0xc] sm:$0xf] %v1731
    // Predicated region
    $region86: #{tpu_custom_call.1} parent=1 // pred_check
      _
    $region87: #{tpu_custom_call.1} parent=1 // pred_check_branch
      %1737 = sbr.rel (0) target = $region89
    $region88: #{tpu_custom_call.1} parent=1 // pred_region
      %1739 = vsyncadd [#allocation4], 0
      %s1740 = sshll.u32 [#allocation16], 4
      %s1741 = int_to_ptr.vmem [resolvable:$true] %s1740
      %s1742 = sshll.u32 %s13, 4
      %s1743 = int_to_ptr.hbm [resolvable:$true] %s1742
      %1748 = dma.vmem_to_hbm [thread:$0]  %s1741, 256, %s1743, [#allocation4], 64, 64, 4
    $region89: #{tpu_custom_call.1} parent=1 // pred_fallthru
      _
    // Predicated region
    $region90: #{tpu_custom_call.1} parent=1 // pred_check
      _
    $region91: #{tpu_custom_call.1} parent=1 // pred_check_branch
      %1750 = sbr.rel (0) target = $region93
    $region92: #{tpu_custom_call.1} parent=1 // pred_region
      %1752 = dma.done [#allocation4], 256
    $region93: #{tpu_custom_call.1} parent=1 // pred_fallthru
      _
    %1753 = vsyncpa [#allocation3], 1
    %1754 = vsyncpa [#allocation6], 1
    %1755 = vsyncpa [#allocation9], 1
    %1756 = vsyncpa [#allocation12], 1
    %1757 = vsyncpa [#allocation15], 1
    %1758 = vsyncpa [#allocation4], 1

</llo_original>
